<compile_context>
chip_gen: v7x
topology: tpu7x:2x2x1
jax: 0.10.0
libtpu: 0.0.40
codegen_flags: <defaults>
</compile_context>

<pallas_src>
import jax
import jax.numpy as jnp
from jax.experimental import pallas as pl
from jax.experimental.pallas import tpu as pltpu


# --------------------------------------------------------------------------- #
# Kernel: per-edge attention + masked softmax + aggregation for one dst tile. #
# --------------------------------------------------------------------------- #
def _shield_attn_kernel(xlT_ref, xl_ref, xr_ref, u_ref, v_ref, mask_ref, ea_ref,
                        att_ref, wedge_ref, sew_ref, bconv_ref,
                        alpha_ref, h_ref):
    C = xr_ref.shape[1]
    tile_i = ea_ref.shape[0]
    n_pad = ea_ref.shape[1]
    cd = ea_ref.dtype                       # compute dtype (f32 or bf16)

    ea = ea_ref[...]                        # (tile_i, n_pad)  compute dtype
    xr = xr_ref[...]                        # (tile_i, C)      compute dtype
    xlT = xlT_ref[...]                      # (C, n_pad)       compute dtype

    # |.|-part of leaky_relu, channel-accumulated (f32 accumulator):
    #   score_abs[i,j] = sum_c 0.4*att_c * | xl[j,c] + xr[i,c] + wedge_c*ea[i,j] |
    score_abs = jnp.zeros((tile_i, n_pad), jnp.float32)
    for c in range(C):                      # static unroll; tiny per-channel body
        wc = wedge_ref[0, c].astype(cd)
        ac = att_ref[0, c].astype(cd)       # already pre-scaled by 0.4 on the host
        pre = xlT[c:c + 1, :] + xr[:, c:c + 1] + wc * ea
        score_abs = score_abs + (ac * jnp.abs(pre)).astype(jnp.float32)

    # rank-1 linear part of leaky_relu (precomputed u, v, sew) + additive mask
    lin = u_ref[...] + v_ref[...] + sew_ref[0, 0] * ea.astype(jnp.float32)
    scores = lin + score_abs + mask_ref[...].astype(jnp.float32)

    # masked softmax over incoming edges (masked entries underflow to exactly 0)
    m = jnp.max(scores, axis=-1, keepdims=True)
    e = jnp.exp(scores - m)
    denom = jnp.sum(e, axis=-1, keepdims=True)
    approx = cd != jnp.float32              # approx EUP rcp on the bf16 prod path
    alpha = e * pl.reciprocal(denom, approx=approx)
    alpha_ref[...] = alpha.astype(alpha_ref.dtype)

    # message aggregation on the MXU + conv bias + ReLU
    out = jnp.dot(alpha.astype(xl_ref.dtype), xl_ref[...],
                  preferred_element_type=jnp.float32) + bconv_ref[...]
    h_ref[...] = jnp.maximum(out, 0.0)


# --------------------------------------------------------------------------- #
# Budget-driven tiling                                                        #
# --------------------------------------------------------------------------- #
def _vmem_capacity_bytes():
    try:
        return int(pltpu.get_tpu_info().vmem_capacity_bytes)
    except Exception:
        return 64 * 1024 * 1024             # conservative default (v7x per-core)


def _pick_tile(n_pad, c, ea_bytes, alpha_bytes, vmem_limit):
    # resident (not double-buffered): xl^T + xl (compute dtype), u + v (f32)
    resident = 2 * n_pad * c * ea_bytes + 2 * n_pad * 4
    # per dst-row cost: double-buffered mask/ea/alpha/h tiles + f32 temporaries
    per_row = (n_pad * (2 * (2 + ea_bytes + alpha_bytes) + 8 + 2 * ea_bytes)
               + 2 * 4 * c)
    budget = max(1 << 22, vmem_limit - resident - (4 << 20))
    cap_rows = max(8, budget // max(per_row, 1))
    best, t = 8, 8
    while t <= min(n_pad, 1024):
        if n_pad % t == 0 and t <= cap_rows:
            best = t
        t += 8
    return best


# --------------------------------------------------------------------------- #
# Forward wrapper                                                             #
# --------------------------------------------------------------------------- #
def shield_forward(x, adj, eattr, params, *, tile_i=None,
                   compute_dtype=jnp.float32, alpha_dtype=None):
    """Returns (class probabilities (1, K), attention matrix (N, N))."""
    if alpha_dtype is None:
        alpha_dtype = compute_dtype
    f32 = jnp.float32

    N, _ = x.shape
    C = params["W_l"].shape[1]
    n_pad = max(128, ((N + 127) // 128) * 128)
    pad_n = n_pad - N

    # ---- GATv2 projections hoisted to XLA (O(N*F*C), tiny) ------------------
    x = x.astype(f32)
    xl = x @ params["W_l"].astype(f32) + params["b_l"].astype(f32)   # (N, C)
    xr = x @ params["W_r"].astype(f32) + params["b_r"].astype(f32)   # (N, C)
    att = params["att"].astype(f32)                                  # (1, C)
    wedge = params["w_edge"].astype(f32)                             # (1, C)

    # rank-1 linear part of leaky_relu(z) = 0.6*z + 0.4*|z|
    u_lin = 0.6 * jnp.sum(xl * att, axis=1)[None, :]                 # (1, N)
    v_lin = 0.6 * jnp.sum(xr * att, axis=1)[:, None]                 # (N, 1)
    sew_lin = (0.6 * jnp.sum(att * wedge)).reshape(1, 1)             # (1, 1)
    att_abs = 0.4 * att                                              # (1, C)

    # ---- pad to a lane-dense N (multiple of 128) -----------------------------
    xl_p = jnp.pad(xl, ((0, pad_n), (0, 0)))
    xr_p = jnp.pad(xr, ((0, pad_n), (0, 0)))
    u_p = jnp.pad(u_lin, ((0, 0), (0, pad_n)))
    v_p = jnp.pad(v_lin, ((0, pad_n), (0, 0)))
    adj_p = jnp.pad(adj.astype(f32), ((0, pad_n), (0, pad_n)))
    ea_p = jnp.pad(eattr.astype(f32), ((0, pad_n), (0, pad_n)))

    # adjacency folded into a narrow additive mask (built with adj > 0)
    mask_bias = jnp.where(adj_p > 0, 0.0, -1e30).astype(jnp.bfloat16)

    xlT_p = xl_p.T.astype(compute_dtype)     # (C, n_pad) channel-major (score loop)
    xl_agg = xl_p.astype(compute_dtype)      # (n_pad, C) node-major (aggregation)
    xr_p = xr_p.astype(compute_dtype)        # (n_pad, C)
    ea_p = ea_p.astype(compute_dtype)        # (n_pad, n_pad)
    b_conv = params["b_conv"].astype(f32)    # (1, C)

    # ---- budget-driven tile size / VMEM limit --------------------------------
    phys_vmem = _vmem_capacity_bytes()
    vmem_limit = int(phys_vmem * 9 // 10)
    ea_b = jnp.dtype(compute_dtype).itemsize
    al_b = jnp.dtype(alpha_dtype).itemsize
    if tile_i is None:
        tile_i = _pick_tile(n_pad, C, ea_b, al_b, vmem_limit)
    assert tile_i % 8 == 0 and n_pad % tile_i == 0, (tile_i, n_pad)
    n_tiles = n_pad // tile_i

    in_specs = [
        pl.BlockSpec((C, n_pad), lambda i: (0, 0)),            # xl^T  (resident)
        pl.BlockSpec((n_pad, C), lambda i: (0, 0)),            # xl    (resident)
        pl.BlockSpec((tile_i, C), lambda i: (i, 0)),           # xr row tile
        pl.BlockSpec((1, n_pad), lambda i: (0, 0)),            # u = 0.6*att.xl
        pl.BlockSpec((tile_i, 1), lambda i: (i, 0)),           # v = 0.6*att.xr
        pl.BlockSpec((tile_i, n_pad), lambda i: (i, 0)),       # mask bias (bf16)
        pl.BlockSpec((tile_i, n_pad), lambda i: (i, 0)),       # edge attr
        pl.BlockSpec(memory_space=pltpu.MemorySpace.SMEM),     # 0.4*att scalars
        pl.BlockSpec(memory_space=pltpu.MemorySpace.SMEM),     # w_edge scalars
        pl.BlockSpec(memory_space=pltpu.MemorySpace.SMEM),     # 0.6*att.wedge
        pl.BlockSpec((1, C), lambda i: (0, 0)),                # conv bias
    ]
    out_specs = (
        pl.BlockSpec((tile_i, n_pad), lambda i: (i, 0)),       # alpha row tile
        pl.BlockSpec((tile_i, C), lambda i: (i, 0)),           # per-node h tile
    )

    alpha_p, h_p = pl.pallas_call(
        _shield_attn_kernel,
        grid=(n_tiles,),
        in_specs=in_specs,
        out_specs=out_specs,
        out_shape=(jax.ShapeDtypeStruct((n_pad, n_pad), alpha_dtype),
                   jax.ShapeDtypeStruct((n_pad, C), f32)),
        compiler_params=pltpu.CompilerParams(
            # No carried state: row-tile axis is fully parallel (2 TCs on v7x).
            dimension_semantics=("parallel",),
            vmem_limit_bytes=vmem_limit,
        ),
    )(xlT_p, xl_agg, xr_p, u_p, v_p, mask_bias, ea_p,
      att_abs, wedge, sew_lin, b_conv)

    # ---- XLA epilogue: mean-pool over true nodes, final Linear, softmax ------
    # TODO(synk): training-mode F.dropout (p=self.dp) not implemented (eval only).
    pooled = jnp.mean(h_p[:N].astype(f32), axis=0, keepdims=True)        # (1, C)
    logits = pooled @ params["W_fin"].astype(f32) + params["b_fin"].astype(f32)
    pred = jax.nn.softmax(logits, axis=1)
    return pred, alpha_p[:N, :N]


# --------------------------------------------------------------------------- #
# Pure-JAX reference                                                          #
# --------------------------------------------------------------------------- #
def shield_reference(x, adj, ea, p):
    xl = x @ p["W_l"] + p["b_l"]
    xr = x @ p["W_r"] + p["b_r"]
    g = xl[None, :, :] + xr[:, None, :] + ea[:, :, None] * p["w_edge"][None, :, :]
    g = jnp.where(g > 0, g, 0.2 * g)
    s = jnp.sum(g * p["att"][None, :, :], axis=-1)
    s = jnp.where(adj > 0, s, -1e30)
    m = jnp.max(s, axis=-1, keepdims=True)
    e = jnp.where(adj > 0, jnp.exp(s - m), 0.0)
    alpha = e / jnp.sum(e, axis=-1, keepdims=True)
    out = alpha @ xl + p["b_conv"]
    h = jnp.maximum(out, 0.0)
    pooled = jnp.mean(h, axis=0, keepdims=True)
    logits = pooled @ p["W_fin"] + p["b_fin"]
    return jax.nn.softmax(logits, axis=1), alpha


if __name__ == "__main__":
    key = jax.random.PRNGKey(0)
    N, F, C, K = 16, 8, 32, 2   # nodes, num_of_feat, layer_1, layer_final
    ks = jax.random.split(key, 12)

    # Node features
    x = jax.random.normal(ks[0], (N, F), jnp.float32)

    # Random directed graph (dst-major adjacency), then add self loops.
    adj_rand = (jax.random.uniform(ks[1], (N, N)) < 0.3).astype(jnp.float32)
    adj_rand = adj_rand * (1.0 - jnp.eye(N, dtype=jnp.float32))
    edge_attr_rand = jax.random.uniform(ks[2], (N, N), jnp.float32) * adj_rand
    n_edges = jnp.maximum(jnp.sum(adj_rand), 1.0)
    mean_attr = jnp.sum(edge_attr_rand) / n_edges          # PyG fill_value='mean'
    adj = adj_rand + jnp.eye(N, dtype=jnp.float32)
    eattr = edge_attr_rand + jnp.eye(N, dtype=jnp.float32) * mean_attr

    # Deterministic synthetic GATv2Conv + Linear parameters
    def glorot(k, shape):
        fan_in, fan_out = shape[0], shape[-1]
        scale = jnp.sqrt(2.0 / (fan_in + fan_out))
        return (jax.random.normal(k, shape, jnp.float32) * scale).astype(jnp.float32)

    params = {
        "W_l": glorot(ks[3], (F, C)),
        "b_l": 0.01 * jax.random.normal(ks[4], (1, C), jnp.float32),
        "W_r": glorot(ks[5], (F, C)),
        "b_r": 0.01 * jax.random.normal(ks[6], (1, C), jnp.float32),
        "w_edge": glorot(ks[7], (1, C)),        # lin_edge weight (edge_dim=1, no bias)
        "att": glorot(ks[8], (1, C)),           # attention vector a
        "b_conv": 0.01 * jax.random.normal(ks[9], (1, C), jnp.float32),
        "W_fin": glorot(ks[10], (C, K)),
        "b_fin": 0.01 * jax.random.normal(ks[11], (1, K), jnp.float32),
    }

    pred_ref, alpha_ref = shield_reference(x, adj, eattr, params)

    # f32 path, explicit small tile -> 4 grid steps across the 'parallel' axis.
    pred, alpha = shield_forward(x, adj, eattr, params, tile_i=32)
    pred = jax.block_until_ready(pred)
    alpha = jax.block_until_ready(alpha)
    assert jnp.allclose(pred, pred_ref, atol=1e-3), "prediction mismatch (f32)"
    assert jnp.allclose(alpha, alpha_ref, atol=1e-3), "attention mismatch (f32)"

    # bf16 production path (bf16 VPU/MXU, bf16 alpha writeback), auto tile size.
    pred_bf, alpha_bf = shield_forward(x, adj, eattr, params,
                                       compute_dtype=jnp.bfloat16)
    pred_bf = jax.block_until_ready(pred_bf)
    alpha_bf = jax.block_until_ready(alpha_bf)
    assert jnp.allclose(pred_bf.astype(jnp.float32), pred_ref, atol=5e-2), \
        "prediction mismatch (bf16)"
    assert jnp.allclose(alpha_bf.astype(jnp.float32), alpha_ref, atol=5e-2), \
        "attention mismatch (bf16)"

    print("KERNEL_OK")
</pallas_src>

<mosaic_0001>
module attributes {stable_mosaic.version = 11 : i64} {
  func.func @_shield_attn_kernel(%arg0: i32, %arg1: memref<32x128xf32, #tpu.memory_space<vmem>>, %arg2: memref<128x32xf32, #tpu.memory_space<vmem>>, %arg3: memref<32x32xf32, #tpu.memory_space<vmem>>, %arg4: memref<1x128xf32, #tpu.memory_space<vmem>>, %arg5: memref<32x1xf32, #tpu.memory_space<vmem>>, %arg6: memref<32x128xbf16, #tpu.memory_space<vmem>>, %arg7: memref<32x128xf32, #tpu.memory_space<vmem>>, %arg8: memref<1x32xf32, #tpu.memory_space<smem>>, %arg9: memref<1x32xf32, #tpu.memory_space<smem>>, %arg10: memref<1x1xf32, #tpu.memory_space<smem>>, %arg11: memref<1x32xf32, #tpu.memory_space<vmem>>, %arg12: memref<32x128xf32, #tpu.memory_space<vmem>>, %arg13: memref<32x32xf32, #tpu.memory_space<vmem>>) attributes {dimension_semantics = [#tpu.dimension_semantics<parallel>], iteration_bounds = array<i64: 4>, scalar_prefetch = 0 : i64, scratch_operands = 0 : i64, tpu.core_type = #tpu.core_type<tc>, window_params = [{pipeline_mode = #tpu.pipeline_mode<synchronous>, transform_indices = @transform_0, window_bounds = array<i64: 32, 128>}, {pipeline_mode = #tpu.pipeline_mode<synchronous>, transform_indices = @transform_1, window_bounds = array<i64: 128, 32>}, {transform_indices = @transform_2, window_bounds = array<i64: 32, 32>}, {pipeline_mode = #tpu.pipeline_mode<synchronous>, transform_indices = @transform_3, window_bounds = array<i64: 1, 128>}, {transform_indices = @transform_4, window_bounds = array<i64: 32, 1>}, {transform_indices = @transform_5, window_bounds = array<i64: 32, 128>}, {transform_indices = @transform_6, window_bounds = array<i64: 32, 128>}, {transform_indices = @transform_7, window_bounds = array<i64: 1, 32>}, {transform_indices = @transform_8, window_bounds = array<i64: 1, 32>}, {transform_indices = @transform_9, window_bounds = array<i64: 1, 1>}, {pipeline_mode = #tpu.pipeline_mode<synchronous>, transform_indices = @transform_10, window_bounds = array<i64: 1, 32>}, {transform_indices = @transform_11, window_bounds = array<i64: 32, 128>}, {transform_indices = @transform_12, window_bounds = array<i64: 32, 32>}]} {
    %c0 = arith.constant 0 : index
    %c0_0 = arith.constant 0 : index
    %0 = vector.load %arg7[%c0, %c0_0] : memref<32x128xf32, #tpu.memory_space<vmem>>, vector<32x128xf32>
    %c0_1 = arith.constant 0 : index
    %c0_2 = arith.constant 0 : index
    %1 = vector.load %arg3[%c0_1, %c0_2] : memref<32x32xf32, #tpu.memory_space<vmem>>, vector<32x32xf32>
    %c0_3 = arith.constant 0 : index
    %c0_4 = arith.constant 0 : index
    %2 = vector.load %arg1[%c0_3, %c0_4] : memref<32x128xf32, #tpu.memory_space<vmem>>, vector<32x128xf32>
    %cst = arith.constant 0.000000e+00 : f32
    %3 = vector.broadcast %cst : f32 to vector<32x128xf32>
    %c0_5 = arith.constant 0 : index
    %c0_6 = arith.constant 0 : index
    %4 = memref.load %arg9[%c0_5, %c0_6] : memref<1x32xf32, #tpu.memory_space<smem>>
    %c0_7 = arith.constant 0 : index
    %c0_8 = arith.constant 0 : index
    %5 = memref.load %arg8[%c0_7, %c0_8] : memref<1x32xf32, #tpu.memory_space<smem>>
    %6 = vector.extract_strided_slice %2 {offsets = [0, 0], sizes = [1, 128], strides = [1, 1]} : vector<32x128xf32> to vector<1x128xf32>
    %7 = vector.extract_strided_slice %1 {offsets = [0, 0], sizes = [32, 1], strides = [1, 1]} : vector<32x32xf32> to vector<32x1xf32>
    %8 = vector.broadcast %6 : vector<1x128xf32> to vector<32x128xf32>
    %9 = vector.broadcast %7 : vector<32x1xf32> to vector<32x128xf32>
    %10 = arith.addf %8, %9 : vector<32x128xf32>
    %11 = vector.broadcast %4 : f32 to vector<32x128xf32>
    %12 = arith.mulf %11, %0 : vector<32x128xf32>
    %13 = arith.addf %10, %12 : vector<32x128xf32>
    %14 = math.absf %13 : vector<32x128xf32>
    %15 = vector.broadcast %5 : f32 to vector<32x128xf32>
    %16 = arith.mulf %15, %14 : vector<32x128xf32>
    %17 = arith.addf %3, %16 : vector<32x128xf32>
    %c0_9 = arith.constant 0 : index
    %c1 = arith.constant 1 : index
    %18 = memref.load %arg9[%c0_9, %c1] : memref<1x32xf32, #tpu.memory_space<smem>>
    %c0_10 = arith.constant 0 : index
    %c1_11 = arith.constant 1 : index
    %19 = memref.load %arg8[%c0_10, %c1_11] : memref<1x32xf32, #tpu.memory_space<smem>>
    %20 = vector.extract_strided_slice %2 {offsets = [1, 0], sizes = [1, 128], strides = [1, 1]} : vector<32x128xf32> to vector<1x128xf32>
    %21 = vector.extract_strided_slice %1 {offsets = [0, 1], sizes = [32, 1], strides = [1, 1]} : vector<32x32xf32> to vector<32x1xf32>
    %22 = vector.broadcast %20 : vector<1x128xf32> to vector<32x128xf32>
    %23 = vector.broadcast %21 : vector<32x1xf32> to vector<32x128xf32>
    %24 = arith.addf %22, %23 : vector<32x128xf32>
    %25 = vector.broadcast %18 : f32 to vector<32x128xf32>
    %26 = arith.mulf %25, %0 : vector<32x128xf32>
    %27 = arith.addf %24, %26 : vector<32x128xf32>
    %28 = math.absf %27 : vector<32x128xf32>
    %29 = vector.broadcast %19 : f32 to vector<32x128xf32>
    %30 = arith.mulf %29, %28 : vector<32x128xf32>
    %31 = arith.addf %17, %30 : vector<32x128xf32>
    %c0_12 = arith.constant 0 : index
    %c2 = arith.constant 2 : index
    %32 = memref.load %arg9[%c0_12, %c2] : memref<1x32xf32, #tpu.memory_space<smem>>
    %c0_13 = arith.constant 0 : index
    %c2_14 = arith.constant 2 : index
    %33 = memref.load %arg8[%c0_13, %c2_14] : memref<1x32xf32, #tpu.memory_space<smem>>
    %34 = vector.extract_strided_slice %2 {offsets = [2, 0], sizes = [1, 128], strides = [1, 1]} : vector<32x128xf32> to vector<1x128xf32>
    %35 = vector.extract_strided_slice %1 {offsets = [0, 2], sizes = [32, 1], strides = [1, 1]} : vector<32x32xf32> to vector<32x1xf32>
    %36 = vector.broadcast %34 : vector<1x128xf32> to vector<32x128xf32>
    %37 = vector.broadcast %35 : vector<32x1xf32> to vector<32x128xf32>
    %38 = arith.addf %36, %37 : vector<32x128xf32>
    %39 = vector.broadcast %32 : f32 to vector<32x128xf32>
    %40 = arith.mulf %39, %0 : vector<32x128xf32>
    %41 = arith.addf %38, %40 : vector<32x128xf32>
    %42 = math.absf %41 : vector<32x128xf32>
    %43 = vector.broadcast %33 : f32 to vector<32x128xf32>
    %44 = arith.mulf %43, %42 : vector<32x128xf32>
    %45 = arith.addf %31, %44 : vector<32x128xf32>
    %c0_15 = arith.constant 0 : index
    %c3 = arith.constant 3 : index
    %46 = memref.load %arg9[%c0_15, %c3] : memref<1x32xf32, #tpu.memory_space<smem>>
    %c0_16 = arith.constant 0 : index
    %c3_17 = arith.constant 3 : index
    %47 = memref.load %arg8[%c0_16, %c3_17] : memref<1x32xf32, #tpu.memory_space<smem>>
    %48 = vector.extract_strided_slice %2 {offsets = [3, 0], sizes = [1, 128], strides = [1, 1]} : vector<32x128xf32> to vector<1x128xf32>
    %49 = vector.extract_strided_slice %1 {offsets = [0, 3], sizes = [32, 1], strides = [1, 1]} : vector<32x32xf32> to vector<32x1xf32>
    %50 = vector.broadcast %48 : vector<1x128xf32> to vector<32x128xf32>
    %51 = vector.broadcast %49 : vector<32x1xf32> to vector<32x128xf32>
    %52 = arith.addf %50, %51 : vector<32x128xf32>
    %53 = vector.broadcast %46 : f32 to vector<32x128xf32>
    %54 = arith.mulf %53, %0 : vector<32x128xf32>
    %55 = arith.addf %52, %54 : vector<32x128xf32>
    %56 = math.absf %55 : vector<32x128xf32>
    %57 = vector.broadcast %47 : f32 to vector<32x128xf32>
    %58 = arith.mulf %57, %56 : vector<32x128xf32>
    %59 = arith.addf %45, %58 : vector<32x128xf32>
    %c0_18 = arith.constant 0 : index
    %c4 = arith.constant 4 : index
    %60 = memref.load %arg9[%c0_18, %c4] : memref<1x32xf32, #tpu.memory_space<smem>>
    %c0_19 = arith.constant 0 : index
    %c4_20 = arith.constant 4 : index
    %61 = memref.load %arg8[%c0_19, %c4_20] : memref<1x32xf32, #tpu.memory_space<smem>>
    %62 = vector.extract_strided_slice %2 {offsets = [4, 0], sizes = [1, 128], strides = [1, 1]} : vector<32x128xf32> to vector<1x128xf32>
    %63 = vector.extract_strided_slice %1 {offsets = [0, 4], sizes = [32, 1], strides = [1, 1]} : vector<32x32xf32> to vector<32x1xf32>
    %64 = vector.broadcast %62 : vector<1x128xf32> to vector<32x128xf32>
    %65 = vector.broadcast %63 : vector<32x1xf32> to vector<32x128xf32>
    %66 = arith.addf %64, %65 : vector<32x128xf32>
    %67 = vector.broadcast %60 : f32 to vector<32x128xf32>
    %68 = arith.mulf %67, %0 : vector<32x128xf32>
    %69 = arith.addf %66, %68 : vector<32x128xf32>
    %70 = math.absf %69 : vector<32x128xf32>
    %71 = vector.broadcast %61 : f32 to vector<32x128xf32>
    %72 = arith.mulf %71, %70 : vector<32x128xf32>
    %73 = arith.addf %59, %72 : vector<32x128xf32>
    %c0_21 = arith.constant 0 : index
    %c5 = arith.constant 5 : index
    %74 = memref.load %arg9[%c0_21, %c5] : memref<1x32xf32, #tpu.memory_space<smem>>
    %c0_22 = arith.constant 0 : index
    %c5_23 = arith.constant 5 : index
    %75 = memref.load %arg8[%c0_22, %c5_23] : memref<1x32xf32, #tpu.memory_space<smem>>
    %76 = vector.extract_strided_slice %2 {offsets = [5, 0], sizes = [1, 128], strides = [1, 1]} : vector<32x128xf32> to vector<1x128xf32>
    %77 = vector.extract_strided_slice %1 {offsets = [0, 5], sizes = [32, 1], strides = [1, 1]} : vector<32x32xf32> to vector<32x1xf32>
    %78 = vector.broadcast %76 : vector<1x128xf32> to vector<32x128xf32>
    %79 = vector.broadcast %77 : vector<32x1xf32> to vector<32x128xf32>
    %80 = arith.addf %78, %79 : vector<32x128xf32>
    %81 = vector.broadcast %74 : f32 to vector<32x128xf32>
    %82 = arith.mulf %81, %0 : vector<32x128xf32>
    %83 = arith.addf %80, %82 : vector<32x128xf32>
    %84 = math.absf %83 : vector<32x128xf32>
    %85 = vector.broadcast %75 : f32 to vector<32x128xf32>
    %86 = arith.mulf %85, %84 : vector<32x128xf32>
    %87 = arith.addf %73, %86 : vector<32x128xf32>
    %c0_24 = arith.constant 0 : index
    %c6 = arith.constant 6 : index
    %88 = memref.load %arg9[%c0_24, %c6] : memref<1x32xf32, #tpu.memory_space<smem>>
    %c0_25 = arith.constant 0 : index
    %c6_26 = arith.constant 6 : index
    %89 = memref.load %arg8[%c0_25, %c6_26] : memref<1x32xf32, #tpu.memory_space<smem>>
    %90 = vector.extract_strided_slice %2 {offsets = [6, 0], sizes = [1, 128], strides = [1, 1]} : vector<32x128xf32> to vector<1x128xf32>
    %91 = vector.extract_strided_slice %1 {offsets = [0, 6], sizes = [32, 1], strides = [1, 1]} : vector<32x32xf32> to vector<32x1xf32>
    %92 = vector.broadcast %90 : vector<1x128xf32> to vector<32x128xf32>
    %93 = vector.broadcast %91 : vector<32x1xf32> to vector<32x128xf32>
    %94 = arith.addf %92, %93 : vector<32x128xf32>
    %95 = vector.broadcast %88 : f32 to vector<32x128xf32>
    %96 = arith.mulf %95, %0 : vector<32x128xf32>
    %97 = arith.addf %94, %96 : vector<32x128xf32>
    %98 = math.absf %97 : vector<32x128xf32>
    %99 = vector.broadcast %89 : f32 to vector<32x128xf32>
    %100 = arith.mulf %99, %98 : vector<32x128xf32>
    %101 = arith.addf %87, %100 : vector<32x128xf32>
    %c0_27 = arith.constant 0 : index
    %c7 = arith.constant 7 : index
    %102 = memref.load %arg9[%c0_27, %c7] : memref<1x32xf32, #tpu.memory_space<smem>>
    %c0_28 = arith.constant 0 : index
    %c7_29 = arith.constant 7 : index
    %103 = memref.load %arg8[%c0_28, %c7_29] : memref<1x32xf32, #tpu.memory_space<smem>>
    %104 = vector.extract_strided_slice %2 {offsets = [7, 0], sizes = [1, 128], strides = [1, 1]} : vector<32x128xf32> to vector<1x128xf32>
    %105 = vector.extract_strided_slice %1 {offsets = [0, 7], sizes = [32, 1], strides = [1, 1]} : vector<32x32xf32> to vector<32x1xf32>
    %106 = vector.broadcast %104 : vector<1x128xf32> to vector<32x128xf32>
    %107 = vector.broadcast %105 : vector<32x1xf32> to vector<32x128xf32>
    %108 = arith.addf %106, %107 : vector<32x128xf32>
    %109 = vector.broadcast %102 : f32 to vector<32x128xf32>
    %110 = arith.mulf %109, %0 : vector<32x128xf32>
    %111 = arith.addf %108, %110 : vector<32x128xf32>
    %112 = math.absf %111 : vector<32x128xf32>
    %113 = vector.broadcast %103 : f32 to vector<32x128xf32>
    %114 = arith.mulf %113, %112 : vector<32x128xf32>
    %115 = arith.addf %101, %114 : vector<32x128xf32>
    %c0_30 = arith.constant 0 : index
    %c8 = arith.constant 8 : index
    %116 = memref.load %arg9[%c0_30, %c8] : memref<1x32xf32, #tpu.memory_space<smem>>
    %c0_31 = arith.constant 0 : index
    %c8_32 = arith.constant 8 : index
    %117 = memref.load %arg8[%c0_31, %c8_32] : memref<1x32xf32, #tpu.memory_space<smem>>
    %118 = vector.extract_strided_slice %2 {offsets = [8, 0], sizes = [1, 128], strides = [1, 1]} : vector<32x128xf32> to vector<1x128xf32>
    %119 = vector.extract_strided_slice %1 {offsets = [0, 8], sizes = [32, 1], strides = [1, 1]} : vector<32x32xf32> to vector<32x1xf32>
    %120 = vector.broadcast %118 : vector<1x128xf32> to vector<32x128xf32>
    %121 = vector.broadcast %119 : vector<32x1xf32> to vector<32x128xf32>
    %122 = arith.addf %120, %121 : vector<32x128xf32>
    %123 = vector.broadcast %116 : f32 to vector<32x128xf32>
    %124 = arith.mulf %123, %0 : vector<32x128xf32>
    %125 = arith.addf %122, %124 : vector<32x128xf32>
    %126 = math.absf %125 : vector<32x128xf32>
    %127 = vector.broadcast %117 : f32 to vector<32x128xf32>
    %128 = arith.mulf %127, %126 : vector<32x128xf32>
    %129 = arith.addf %115, %128 : vector<32x128xf32>
    %c0_33 = arith.constant 0 : index
    %c9 = arith.constant 9 : index
    %130 = memref.load %arg9[%c0_33, %c9] : memref<1x32xf32, #tpu.memory_space<smem>>
    %c0_34 = arith.constant 0 : index
    %c9_35 = arith.constant 9 : index
    %131 = memref.load %arg8[%c0_34, %c9_35] : memref<1x32xf32, #tpu.memory_space<smem>>
    %132 = vector.extract_strided_slice %2 {offsets = [9, 0], sizes = [1, 128], strides = [1, 1]} : vector<32x128xf32> to vector<1x128xf32>
    %133 = vector.extract_strided_slice %1 {offsets = [0, 9], sizes = [32, 1], strides = [1, 1]} : vector<32x32xf32> to vector<32x1xf32>
    %134 = vector.broadcast %132 : vector<1x128xf32> to vector<32x128xf32>
    %135 = vector.broadcast %133 : vector<32x1xf32> to vector<32x128xf32>
    %136 = arith.addf %134, %135 : vector<32x128xf32>
    %137 = vector.broadcast %130 : f32 to vector<32x128xf32>
    %138 = arith.mulf %137, %0 : vector<32x128xf32>
    %139 = arith.addf %136, %138 : vector<32x128xf32>
    %140 = math.absf %139 : vector<32x128xf32>
    %141 = vector.broadcast %131 : f32 to vector<32x128xf32>
    %142 = arith.mulf %141, %140 : vector<32x128xf32>
    %143 = arith.addf %129, %142 : vector<32x128xf32>
    %c0_36 = arith.constant 0 : index
    %c10 = arith.constant 10 : index
    %144 = memref.load %arg9[%c0_36, %c10] : memref<1x32xf32, #tpu.memory_space<smem>>
    %c0_37 = arith.constant 0 : index
    %c10_38 = arith.constant 10 : index
    %145 = memref.load %arg8[%c0_37, %c10_38] : memref<1x32xf32, #tpu.memory_space<smem>>
    %146 = vector.extract_strided_slice %2 {offsets = [10, 0], sizes = [1, 128], strides = [1, 1]} : vector<32x128xf32> to vector<1x128xf32>
    %147 = vector.extract_strided_slice %1 {offsets = [0, 10], sizes = [32, 1], strides = [1, 1]} : vector<32x32xf32> to vector<32x1xf32>
    %148 = vector.broadcast %146 : vector<1x128xf32> to vector<32x128xf32>
    %149 = vector.broadcast %147 : vector<32x1xf32> to vector<32x128xf32>
    %150 = arith.addf %148, %149 : vector<32x128xf32>
    %151 = vector.broadcast %144 : f32 to vector<32x128xf32>
    %152 = arith.mulf %151, %0 : vector<32x128xf32>
    %153 = arith.addf %150, %152 : vector<32x128xf32>
    %154 = math.absf %153 : vector<32x128xf32>
    %155 = vector.broadcast %145 : f32 to vector<32x128xf32>
    %156 = arith.mulf %155, %154 : vector<32x128xf32>
    %157 = arith.addf %143, %156 : vector<32x128xf32>
    %c0_39 = arith.constant 0 : index
    %c11 = arith.constant 11 : index
    %158 = memref.load %arg9[%c0_39, %c11] : memref<1x32xf32, #tpu.memory_space<smem>>
    %c0_40 = arith.constant 0 : index
    %c11_41 = arith.constant 11 : index
    %159 = memref.load %arg8[%c0_40, %c11_41] : memref<1x32xf32, #tpu.memory_space<smem>>
    %160 = vector.extract_strided_slice %2 {offsets = [11, 0], sizes = [1, 128], strides = [1, 1]} : vector<32x128xf32> to vector<1x128xf32>
    %161 = vector.extract_strided_slice %1 {offsets = [0, 11], sizes = [32, 1], strides = [1, 1]} : vector<32x32xf32> to vector<32x1xf32>
    %162 = vector.broadcast %160 : vector<1x128xf32> to vector<32x128xf32>
    %163 = vector.broadcast %161 : vector<32x1xf32> to vector<32x128xf32>
    %164 = arith.addf %162, %163 : vector<32x128xf32>
    %165 = vector.broadcast %158 : f32 to vector<32x128xf32>
    %166 = arith.mulf %165, %0 : vector<32x128xf32>
    %167 = arith.addf %164, %166 : vector<32x128xf32>
    %168 = math.absf %167 : vector<32x128xf32>
    %169 = vector.broadcast %159 : f32 to vector<32x128xf32>
    %170 = arith.mulf %169, %168 : vector<32x128xf32>
    %171 = arith.addf %157, %170 : vector<32x128xf32>
    %c0_42 = arith.constant 0 : index
    %c12 = arith.constant 12 : index
    %172 = memref.load %arg9[%c0_42, %c12] : memref<1x32xf32, #tpu.memory_space<smem>>
    %c0_43 = arith.constant 0 : index
    %c12_44 = arith.constant 12 : index
    %173 = memref.load %arg8[%c0_43, %c12_44] : memref<1x32xf32, #tpu.memory_space<smem>>
    %174 = vector.extract_strided_slice %2 {offsets = [12, 0], sizes = [1, 128], strides = [1, 1]} : vector<32x128xf32> to vector<1x128xf32>
    %175 = vector.extract_strided_slice %1 {offsets = [0, 12], sizes = [32, 1], strides = [1, 1]} : vector<32x32xf32> to vector<32x1xf32>
    %176 = vector.broadcast %174 : vector<1x128xf32> to vector<32x128xf32>
    %177 = vector.broadcast %175 : vector<32x1xf32> to vector<32x128xf32>
    %178 = arith.addf %176, %177 : vector<32x128xf32>
    %179 = vector.broadcast %172 : f32 to vector<32x128xf32>
    %180 = arith.mulf %179, %0 : vector<32x128xf32>
    %181 = arith.addf %178, %180 : vector<32x128xf32>
    %182 = math.absf %181 : vector<32x128xf32>
    %183 = vector.broadcast %173 : f32 to vector<32x128xf32>
    %184 = arith.mulf %183, %182 : vector<32x128xf32>
    %185 = arith.addf %171, %184 : vector<32x128xf32>
    %c0_45 = arith.constant 0 : index
    %c13 = arith.constant 13 : index
    %186 = memref.load %arg9[%c0_45, %c13] : memref<1x32xf32, #tpu.memory_space<smem>>
    %c0_46 = arith.constant 0 : index
    %c13_47 = arith.constant 13 : index
    %187 = memref.load %arg8[%c0_46, %c13_47] : memref<1x32xf32, #tpu.memory_space<smem>>
    %188 = vector.extract_strided_slice %2 {offsets = [13, 0], sizes = [1, 128], strides = [1, 1]} : vector<32x128xf32> to vector<1x128xf32>
    %189 = vector.extract_strided_slice %1 {offsets = [0, 13], sizes = [32, 1], strides = [1, 1]} : vector<32x32xf32> to vector<32x1xf32>
    %190 = vector.broadcast %188 : vector<1x128xf32> to vector<32x128xf32>
    %191 = vector.broadcast %189 : vector<32x1xf32> to vector<32x128xf32>
    %192 = arith.addf %190, %191 : vector<32x128xf32>
    %193 = vector.broadcast %186 : f32 to vector<32x128xf32>
    %194 = arith.mulf %193, %0 : vector<32x128xf32>
    %195 = arith.addf %192, %194 : vector<32x128xf32>
    %196 = math.absf %195 : vector<32x128xf32>
    %197 = vector.broadcast %187 : f32 to vector<32x128xf32>
    %198 = arith.mulf %197, %196 : vector<32x128xf32>
    %199 = arith.addf %185, %198 : vector<32x128xf32>
    %c0_48 = arith.constant 0 : index
    %c14 = arith.constant 14 : index
    %200 = memref.load %arg9[%c0_48, %c14] : memref<1x32xf32, #tpu.memory_space<smem>>
    %c0_49 = arith.constant 0 : index
    %c14_50 = arith.constant 14 : index
    %201 = memref.load %arg8[%c0_49, %c14_50] : memref<1x32xf32, #tpu.memory_space<smem>>
    %202 = vector.extract_strided_slice %2 {offsets = [14, 0], sizes = [1, 128], strides = [1, 1]} : vector<32x128xf32> to vector<1x128xf32>
    %203 = vector.extract_strided_slice %1 {offsets = [0, 14], sizes = [32, 1], strides = [1, 1]} : vector<32x32xf32> to vector<32x1xf32>
    %204 = vector.broadcast %202 : vector<1x128xf32> to vector<32x128xf32>
    %205 = vector.broadcast %203 : vector<32x1xf32> to vector<32x128xf32>
    %206 = arith.addf %204, %205 : vector<32x128xf32>
    %207 = vector.broadcast %200 : f32 to vector<32x128xf32>
    %208 = arith.mulf %207, %0 : vector<32x128xf32>
    %209 = arith.addf %206, %208 : vector<32x128xf32>
    %210 = math.absf %209 : vector<32x128xf32>
    %211 = vector.broadcast %201 : f32 to vector<32x128xf32>
    %212 = arith.mulf %211, %210 : vector<32x128xf32>
    %213 = arith.addf %199, %212 : vector<32x128xf32>
    %c0_51 = arith.constant 0 : index
    %c15 = arith.constant 15 : index
    %214 = memref.load %arg9[%c0_51, %c15] : memref<1x32xf32, #tpu.memory_space<smem>>
    %c0_52 = arith.constant 0 : index
    %c15_53 = arith.constant 15 : index
    %215 = memref.load %arg8[%c0_52, %c15_53] : memref<1x32xf32, #tpu.memory_space<smem>>
    %216 = vector.extract_strided_slice %2 {offsets = [15, 0], sizes = [1, 128], strides = [1, 1]} : vector<32x128xf32> to vector<1x128xf32>
    %217 = vector.extract_strided_slice %1 {offsets = [0, 15], sizes = [32, 1], strides = [1, 1]} : vector<32x32xf32> to vector<32x1xf32>
    %218 = vector.broadcast %216 : vector<1x128xf32> to vector<32x128xf32>
    %219 = vector.broadcast %217 : vector<32x1xf32> to vector<32x128xf32>
    %220 = arith.addf %218, %219 : vector<32x128xf32>
    %221 = vector.broadcast %214 : f32 to vector<32x128xf32>
    %222 = arith.mulf %221, %0 : vector<32x128xf32>
    %223 = arith.addf %220, %222 : vector<32x128xf32>
    %224 = math.absf %223 : vector<32x128xf32>
    %225 = vector.broadcast %215 : f32 to vector<32x128xf32>
    %226 = arith.mulf %225, %224 : vector<32x128xf32>
    %227 = arith.addf %213, %226 : vector<32x128xf32>
    %c0_54 = arith.constant 0 : index
    %c16 = arith.constant 16 : index
    %228 = memref.load %arg9[%c0_54, %c16] : memref<1x32xf32, #tpu.memory_space<smem>>
    %c0_55 = arith.constant 0 : index
    %c16_56 = arith.constant 16 : index
    %229 = memref.load %arg8[%c0_55, %c16_56] : memref<1x32xf32, #tpu.memory_space<smem>>
    %230 = vector.extract_strided_slice %2 {offsets = [16, 0], sizes = [1, 128], strides = [1, 1]} : vector<32x128xf32> to vector<1x128xf32>
    %231 = vector.extract_strided_slice %1 {offsets = [0, 16], sizes = [32, 1], strides = [1, 1]} : vector<32x32xf32> to vector<32x1xf32>
    %232 = vector.broadcast %230 : vector<1x128xf32> to vector<32x128xf32>
    %233 = vector.broadcast %231 : vector<32x1xf32> to vector<32x128xf32>
    %234 = arith.addf %232, %233 : vector<32x128xf32>
    %235 = vector.broadcast %228 : f32 to vector<32x128xf32>
    %236 = arith.mulf %235, %0 : vector<32x128xf32>
    %237 = arith.addf %234, %236 : vector<32x128xf32>
    %238 = math.absf %237 : vector<32x128xf32>
    %239 = vector.broadcast %229 : f32 to vector<32x128xf32>
    %240 = arith.mulf %239, %238 : vector<32x128xf32>
    %241 = arith.addf %227, %240 : vector<32x128xf32>
    %c0_57 = arith.constant 0 : index
    %c17 = arith.constant 17 : index
    %242 = memref.load %arg9[%c0_57, %c17] : memref<1x32xf32, #tpu.memory_space<smem>>
    %c0_58 = arith.constant 0 : index
    %c17_59 = arith.constant 17 : index
    %243 = memref.load %arg8[%c0_58, %c17_59] : memref<1x32xf32, #tpu.memory_space<smem>>
    %244 = vector.extract_strided_slice %2 {offsets = [17, 0], sizes = [1, 128], strides = [1, 1]} : vector<32x128xf32> to vector<1x128xf32>
    %245 = vector.extract_strided_slice %1 {offsets = [0, 17], sizes = [32, 1], strides = [1, 1]} : vector<32x32xf32> to vector<32x1xf32>
    %246 = vector.broadcast %244 : vector<1x128xf32> to vector<32x128xf32>
    %247 = vector.broadcast %245 : vector<32x1xf32> to vector<32x128xf32>
    %248 = arith.addf %246, %247 : vector<32x128xf32>
    %249 = vector.broadcast %242 : f32 to vector<32x128xf32>
    %250 = arith.mulf %249, %0 : vector<32x128xf32>
    %251 = arith.addf %248, %250 : vector<32x128xf32>
    %252 = math.absf %251 : vector<32x128xf32>
    %253 = vector.broadcast %243 : f32 to vector<32x128xf32>
    %254 = arith.mulf %253, %252 : vector<32x128xf32>
    %255 = arith.addf %241, %254 : vector<32x128xf32>
    %c0_60 = arith.constant 0 : index
    %c18 = arith.constant 18 : index
    %256 = memref.load %arg9[%c0_60, %c18] : memref<1x32xf32, #tpu.memory_space<smem>>
    %c0_61 = arith.constant 0 : index
    %c18_62 = arith.constant 18 : index
    %257 = memref.load %arg8[%c0_61, %c18_62] : memref<1x32xf32, #tpu.memory_space<smem>>
    %258 = vector.extract_strided_slice %2 {offsets = [18, 0], sizes = [1, 128], strides = [1, 1]} : vector<32x128xf32> to vector<1x128xf32>
    %259 = vector.extract_strided_slice %1 {offsets = [0, 18], sizes = [32, 1], strides = [1, 1]} : vector<32x32xf32> to vector<32x1xf32>
    %260 = vector.broadcast %258 : vector<1x128xf32> to vector<32x128xf32>
    %261 = vector.broadcast %259 : vector<32x1xf32> to vector<32x128xf32>
    %262 = arith.addf %260, %261 : vector<32x128xf32>
    %263 = vector.broadcast %256 : f32 to vector<32x128xf32>
    %264 = arith.mulf %263, %0 : vector<32x128xf32>
    %265 = arith.addf %262, %264 : vector<32x128xf32>
    %266 = math.absf %265 : vector<32x128xf32>
    %267 = vector.broadcast %257 : f32 to vector<32x128xf32>
    %268 = arith.mulf %267, %266 : vector<32x128xf32>
    %269 = arith.addf %255, %268 : vector<32x128xf32>
    %c0_63 = arith.constant 0 : index
    %c19 = arith.constant 19 : index
    %270 = memref.load %arg9[%c0_63, %c19] : memref<1x32xf32, #tpu.memory_space<smem>>
    %c0_64 = arith.constant 0 : index
    %c19_65 = arith.constant 19 : index
    %271 = memref.load %arg8[%c0_64, %c19_65] : memref<1x32xf32, #tpu.memory_space<smem>>
    %272 = vector.extract_strided_slice %2 {offsets = [19, 0], sizes = [1, 128], strides = [1, 1]} : vector<32x128xf32> to vector<1x128xf32>
    %273 = vector.extract_strided_slice %1 {offsets = [0, 19], sizes = [32, 1], strides = [1, 1]} : vector<32x32xf32> to vector<32x1xf32>
    %274 = vector.broadcast %272 : vector<1x128xf32> to vector<32x128xf32>
    %275 = vector.broadcast %273 : vector<32x1xf32> to vector<32x128xf32>
    %276 = arith.addf %274, %275 : vector<32x128xf32>
    %277 = vector.broadcast %270 : f32 to vector<32x128xf32>
    %278 = arith.mulf %277, %0 : vector<32x128xf32>
    %279 = arith.addf %276, %278 : vector<32x128xf32>
    %280 = math.absf %279 : vector<32x128xf32>
    %281 = vector.broadcast %271 : f32 to vector<32x128xf32>
    %282 = arith.mulf %281, %280 : vector<32x128xf32>
    %283 = arith.addf %269, %282 : vector<32x128xf32>
    %c0_66 = arith.constant 0 : index
    %c20 = arith.constant 20 : index
    %284 = memref.load %arg9[%c0_66, %c20] : memref<1x32xf32, #tpu.memory_space<smem>>
    %c0_67 = arith.constant 0 : index
    %c20_68 = arith.constant 20 : index
    %285 = memref.load %arg8[%c0_67, %c20_68] : memref<1x32xf32, #tpu.memory_space<smem>>
    %286 = vector.extract_strided_slice %2 {offsets = [20, 0], sizes = [1, 128], strides = [1, 1]} : vector<32x128xf32> to vector<1x128xf32>
    %287 = vector.extract_strided_slice %1 {offsets = [0, 20], sizes = [32, 1], strides = [1, 1]} : vector<32x32xf32> to vector<32x1xf32>
    %288 = vector.broadcast %286 : vector<1x128xf32> to vector<32x128xf32>
    %289 = vector.broadcast %287 : vector<32x1xf32> to vector<32x128xf32>
    %290 = arith.addf %288, %289 : vector<32x128xf32>
    %291 = vector.broadcast %284 : f32 to vector<32x128xf32>
    %292 = arith.mulf %291, %0 : vector<32x128xf32>
    %293 = arith.addf %290, %292 : vector<32x128xf32>
    %294 = math.absf %293 : vector<32x128xf32>
    %295 = vector.broadcast %285 : f32 to vector<32x128xf32>
    %296 = arith.mulf %295, %294 : vector<32x128xf32>
    %297 = arith.addf %283, %296 : vector<32x128xf32>
    %c0_69 = arith.constant 0 : index
    %c21 = arith.constant 21 : index
    %298 = memref.load %arg9[%c0_69, %c21] : memref<1x32xf32, #tpu.memory_space<smem>>
    %c0_70 = arith.constant 0 : index
    %c21_71 = arith.constant 21 : index
    %299 = memref.load %arg8[%c0_70, %c21_71] : memref<1x32xf32, #tpu.memory_space<smem>>
    %300 = vector.extract_strided_slice %2 {offsets = [21, 0], sizes = [1, 128], strides = [1, 1]} : vector<32x128xf32> to vector<1x128xf32>
    %301 = vector.extract_strided_slice %1 {offsets = [0, 21], sizes = [32, 1], strides = [1, 1]} : vector<32x32xf32> to vector<32x1xf32>
    %302 = vector.broadcast %300 : vector<1x128xf32> to vector<32x128xf32>
    %303 = vector.broadcast %301 : vector<32x1xf32> to vector<32x128xf32>
    %304 = arith.addf %302, %303 : vector<32x128xf32>
    %305 = vector.broadcast %298 : f32 to vector<32x128xf32>
    %306 = arith.mulf %305, %0 : vector<32x128xf32>
    %307 = arith.addf %304, %306 : vector<32x128xf32>
    %308 = math.absf %307 : vector<32x128xf32>
    %309 = vector.broadcast %299 : f32 to vector<32x128xf32>
    %310 = arith.mulf %309, %308 : vector<32x128xf32>
    %311 = arith.addf %297, %310 : vector<32x128xf32>
    %c0_72 = arith.constant 0 : index
    %c22 = arith.constant 22 : index
    %312 = memref.load %arg9[%c0_72, %c22] : memref<1x32xf32, #tpu.memory_space<smem>>
    %c0_73 = arith.constant 0 : index
    %c22_74 = arith.constant 22 : index
    %313 = memref.load %arg8[%c0_73, %c22_74] : memref<1x32xf32, #tpu.memory_space<smem>>
    %314 = vector.extract_strided_slice %2 {offsets = [22, 0], sizes = [1, 128], strides = [1, 1]} : vector<32x128xf32> to vector<1x128xf32>
    %315 = vector.extract_strided_slice %1 {offsets = [0, 22], sizes = [32, 1], strides = [1, 1]} : vector<32x32xf32> to vector<32x1xf32>
    %316 = vector.broadcast %314 : vector<1x128xf32> to vector<32x128xf32>
    %317 = vector.broadcast %315 : vector<32x1xf32> to vector<32x128xf32>
    %318 = arith.addf %316, %317 : vector<32x128xf32>
    %319 = vector.broadcast %312 : f32 to vector<32x128xf32>
    %320 = arith.mulf %319, %0 : vector<32x128xf32>
    %321 = arith.addf %318, %320 : vector<32x128xf32>
    %322 = math.absf %321 : vector<32x128xf32>
    %323 = vector.broadcast %313 : f32 to vector<32x128xf32>
    %324 = arith.mulf %323, %322 : vector<32x128xf32>
    %325 = arith.addf %311, %324 : vector<32x128xf32>
    %c0_75 = arith.constant 0 : index
    %c23 = arith.constant 23 : index
    %326 = memref.load %arg9[%c0_75, %c23] : memref<1x32xf32, #tpu.memory_space<smem>>
    %c0_76 = arith.constant 0 : index
    %c23_77 = arith.constant 23 : index
    %327 = memref.load %arg8[%c0_76, %c23_77] : memref<1x32xf32, #tpu.memory_space<smem>>
    %328 = vector.extract_strided_slice %2 {offsets = [23, 0], sizes = [1, 128], strides = [1, 1]} : vector<32x128xf32> to vector<1x128xf32>
    %329 = vector.extract_strided_slice %1 {offsets = [0, 23], sizes = [32, 1], strides = [1, 1]} : vector<32x32xf32> to vector<32x1xf32>
    %330 = vector.broadcast %328 : vector<1x128xf32> to vector<32x128xf32>
    %331 = vector.broadcast %329 : vector<32x1xf32> to vector<32x128xf32>
    %332 = arith.addf %330, %331 : vector<32x128xf32>
    %333 = vector.broadcast %326 : f32 to vector<32x128xf32>
    %334 = arith.mulf %333, %0 : vector<32x128xf32>
    %335 = arith.addf %332, %334 : vector<32x128xf32>
    %336 = math.absf %335 : vector<32x128xf32>
    %337 = vector.broadcast %327 : f32 to vector<32x128xf32>
    %338 = arith.mulf %337, %336 : vector<32x128xf32>
    %339 = arith.addf %325, %338 : vector<32x128xf32>
    %c0_78 = arith.constant 0 : index
    %c24 = arith.constant 24 : index
    %340 = memref.load %arg9[%c0_78, %c24] : memref<1x32xf32, #tpu.memory_space<smem>>
    %c0_79 = arith.constant 0 : index
    %c24_80 = arith.constant 24 : index
    %341 = memref.load %arg8[%c0_79, %c24_80] : memref<1x32xf32, #tpu.memory_space<smem>>
    %342 = vector.extract_strided_slice %2 {offsets = [24, 0], sizes = [1, 128], strides = [1, 1]} : vector<32x128xf32> to vector<1x128xf32>
    %343 = vector.extract_strided_slice %1 {offsets = [0, 24], sizes = [32, 1], strides = [1, 1]} : vector<32x32xf32> to vector<32x1xf32>
    %344 = vector.broadcast %342 : vector<1x128xf32> to vector<32x128xf32>
    %345 = vector.broadcast %343 : vector<32x1xf32> to vector<32x128xf32>
    %346 = arith.addf %344, %345 : vector<32x128xf32>
    %347 = vector.broadcast %340 : f32 to vector<32x128xf32>
    %348 = arith.mulf %347, %0 : vector<32x128xf32>
    %349 = arith.addf %346, %348 : vector<32x128xf32>
    %350 = math.absf %349 : vector<32x128xf32>
    %351 = vector.broadcast %341 : f32 to vector<32x128xf32>
    %352 = arith.mulf %351, %350 : vector<32x128xf32>
    %353 = arith.addf %339, %352 : vector<32x128xf32>
    %c0_81 = arith.constant 0 : index
    %c25 = arith.constant 25 : index
    %354 = memref.load %arg9[%c0_81, %c25] : memref<1x32xf32, #tpu.memory_space<smem>>
    %c0_82 = arith.constant 0 : index
    %c25_83 = arith.constant 25 : index
    %355 = memref.load %arg8[%c0_82, %c25_83] : memref<1x32xf32, #tpu.memory_space<smem>>
    %356 = vector.extract_strided_slice %2 {offsets = [25, 0], sizes = [1, 128], strides = [1, 1]} : vector<32x128xf32> to vector<1x128xf32>
    %357 = vector.extract_strided_slice %1 {offsets = [0, 25], sizes = [32, 1], strides = [1, 1]} : vector<32x32xf32> to vector<32x1xf32>
    %358 = vector.broadcast %356 : vector<1x128xf32> to vector<32x128xf32>
    %359 = vector.broadcast %357 : vector<32x1xf32> to vector<32x128xf32>
    %360 = arith.addf %358, %359 : vector<32x128xf32>
    %361 = vector.broadcast %354 : f32 to vector<32x128xf32>
    %362 = arith.mulf %361, %0 : vector<32x128xf32>
    %363 = arith.addf %360, %362 : vector<32x128xf32>
    %364 = math.absf %363 : vector<32x128xf32>
    %365 = vector.broadcast %355 : f32 to vector<32x128xf32>
    %366 = arith.mulf %365, %364 : vector<32x128xf32>
    %367 = arith.addf %353, %366 : vector<32x128xf32>
    %c0_84 = arith.constant 0 : index
    %c26 = arith.constant 26 : index
    %368 = memref.load %arg9[%c0_84, %c26] : memref<1x32xf32, #tpu.memory_space<smem>>
    %c0_85 = arith.constant 0 : index
    %c26_86 = arith.constant 26 : index
    %369 = memref.load %arg8[%c0_85, %c26_86] : memref<1x32xf32, #tpu.memory_space<smem>>
    %370 = vector.extract_strided_slice %2 {offsets = [26, 0], sizes = [1, 128], strides = [1, 1]} : vector<32x128xf32> to vector<1x128xf32>
    %371 = vector.extract_strided_slice %1 {offsets = [0, 26], sizes = [32, 1], strides = [1, 1]} : vector<32x32xf32> to vector<32x1xf32>
    %372 = vector.broadcast %370 : vector<1x128xf32> to vector<32x128xf32>
    %373 = vector.broadcast %371 : vector<32x1xf32> to vector<32x128xf32>
    %374 = arith.addf %372, %373 : vector<32x128xf32>
    %375 = vector.broadcast %368 : f32 to vector<32x128xf32>
    %376 = arith.mulf %375, %0 : vector<32x128xf32>
    %377 = arith.addf %374, %376 : vector<32x128xf32>
    %378 = math.absf %377 : vector<32x128xf32>
    %379 = vector.broadcast %369 : f32 to vector<32x128xf32>
    %380 = arith.mulf %379, %378 : vector<32x128xf32>
    %381 = arith.addf %367, %380 : vector<32x128xf32>
    %c0_87 = arith.constant 0 : index
    %c27 = arith.constant 27 : index
    %382 = memref.load %arg9[%c0_87, %c27] : memref<1x32xf32, #tpu.memory_space<smem>>
    %c0_88 = arith.constant 0 : index
    %c27_89 = arith.constant 27 : index
    %383 = memref.load %arg8[%c0_88, %c27_89] : memref<1x32xf32, #tpu.memory_space<smem>>
    %384 = vector.extract_strided_slice %2 {offsets = [27, 0], sizes = [1, 128], strides = [1, 1]} : vector<32x128xf32> to vector<1x128xf32>
    %385 = vector.extract_strided_slice %1 {offsets = [0, 27], sizes = [32, 1], strides = [1, 1]} : vector<32x32xf32> to vector<32x1xf32>
    %386 = vector.broadcast %384 : vector<1x128xf32> to vector<32x128xf32>
    %387 = vector.broadcast %385 : vector<32x1xf32> to vector<32x128xf32>
    %388 = arith.addf %386, %387 : vector<32x128xf32>
    %389 = vector.broadcast %382 : f32 to vector<32x128xf32>
    %390 = arith.mulf %389, %0 : vector<32x128xf32>
    %391 = arith.addf %388, %390 : vector<32x128xf32>
    %392 = math.absf %391 : vector<32x128xf32>
    %393 = vector.broadcast %383 : f32 to vector<32x128xf32>
    %394 = arith.mulf %393, %392 : vector<32x128xf32>
    %395 = arith.addf %381, %394 : vector<32x128xf32>
    %c0_90 = arith.constant 0 : index
    %c28 = arith.constant 28 : index
    %396 = memref.load %arg9[%c0_90, %c28] : memref<1x32xf32, #tpu.memory_space<smem>>
    %c0_91 = arith.constant 0 : index
    %c28_92 = arith.constant 28 : index
    %397 = memref.load %arg8[%c0_91, %c28_92] : memref<1x32xf32, #tpu.memory_space<smem>>
    %398 = vector.extract_strided_slice %2 {offsets = [28, 0], sizes = [1, 128], strides = [1, 1]} : vector<32x128xf32> to vector<1x128xf32>
    %399 = vector.extract_strided_slice %1 {offsets = [0, 28], sizes = [32, 1], strides = [1, 1]} : vector<32x32xf32> to vector<32x1xf32>
    %400 = vector.broadcast %398 : vector<1x128xf32> to vector<32x128xf32>
    %401 = vector.broadcast %399 : vector<32x1xf32> to vector<32x128xf32>
    %402 = arith.addf %400, %401 : vector<32x128xf32>
    %403 = vector.broadcast %396 : f32 to vector<32x128xf32>
    %404 = arith.mulf %403, %0 : vector<32x128xf32>
    %405 = arith.addf %402, %404 : vector<32x128xf32>
    %406 = math.absf %405 : vector<32x128xf32>
    %407 = vector.broadcast %397 : f32 to vector<32x128xf32>
    %408 = arith.mulf %407, %406 : vector<32x128xf32>
    %409 = arith.addf %395, %408 : vector<32x128xf32>
    %c0_93 = arith.constant 0 : index
    %c29 = arith.constant 29 : index
    %410 = memref.load %arg9[%c0_93, %c29] : memref<1x32xf32, #tpu.memory_space<smem>>
    %c0_94 = arith.constant 0 : index
    %c29_95 = arith.constant 29 : index
    %411 = memref.load %arg8[%c0_94, %c29_95] : memref<1x32xf32, #tpu.memory_space<smem>>
    %412 = vector.extract_strided_slice %2 {offsets = [29, 0], sizes = [1, 128], strides = [1, 1]} : vector<32x128xf32> to vector<1x128xf32>
    %413 = vector.extract_strided_slice %1 {offsets = [0, 29], sizes = [32, 1], strides = [1, 1]} : vector<32x32xf32> to vector<32x1xf32>
    %414 = vector.broadcast %412 : vector<1x128xf32> to vector<32x128xf32>
    %415 = vector.broadcast %413 : vector<32x1xf32> to vector<32x128xf32>
    %416 = arith.addf %414, %415 : vector<32x128xf32>
    %417 = vector.broadcast %410 : f32 to vector<32x128xf32>
    %418 = arith.mulf %417, %0 : vector<32x128xf32>
    %419 = arith.addf %416, %418 : vector<32x128xf32>
    %420 = math.absf %419 : vector<32x128xf32>
    %421 = vector.broadcast %411 : f32 to vector<32x128xf32>
    %422 = arith.mulf %421, %420 : vector<32x128xf32>
    %423 = arith.addf %409, %422 : vector<32x128xf32>
    %c0_96 = arith.constant 0 : index
    %c30 = arith.constant 30 : index
    %424 = memref.load %arg9[%c0_96, %c30] : memref<1x32xf32, #tpu.memory_space<smem>>
    %c0_97 = arith.constant 0 : index
    %c30_98 = arith.constant 30 : index
    %425 = memref.load %arg8[%c0_97, %c30_98] : memref<1x32xf32, #tpu.memory_space<smem>>
    %426 = vector.extract_strided_slice %2 {offsets = [30, 0], sizes = [1, 128], strides = [1, 1]} : vector<32x128xf32> to vector<1x128xf32>
    %427 = vector.extract_strided_slice %1 {offsets = [0, 30], sizes = [32, 1], strides = [1, 1]} : vector<32x32xf32> to vector<32x1xf32>
    %428 = vector.broadcast %426 : vector<1x128xf32> to vector<32x128xf32>
    %429 = vector.broadcast %427 : vector<32x1xf32> to vector<32x128xf32>
    %430 = arith.addf %428, %429 : vector<32x128xf32>
    %431 = vector.broadcast %424 : f32 to vector<32x128xf32>
    %432 = arith.mulf %431, %0 : vector<32x128xf32>
    %433 = arith.addf %430, %432 : vector<32x128xf32>
    %434 = math.absf %433 : vector<32x128xf32>
    %435 = vector.broadcast %425 : f32 to vector<32x128xf32>
    %436 = arith.mulf %435, %434 : vector<32x128xf32>
    %437 = arith.addf %423, %436 : vector<32x128xf32>
    %c0_99 = arith.constant 0 : index
    %c31 = arith.constant 31 : index
    %438 = memref.load %arg9[%c0_99, %c31] : memref<1x32xf32, #tpu.memory_space<smem>>
    %c0_100 = arith.constant 0 : index
    %c31_101 = arith.constant 31 : index
    %439 = memref.load %arg8[%c0_100, %c31_101] : memref<1x32xf32, #tpu.memory_space<smem>>
    %440 = vector.extract_strided_slice %2 {offsets = [31, 0], sizes = [1, 128], strides = [1, 1]} : vector<32x128xf32> to vector<1x128xf32>
    %441 = vector.extract_strided_slice %1 {offsets = [0, 31], sizes = [32, 1], strides = [1, 1]} : vector<32x32xf32> to vector<32x1xf32>
    %442 = vector.broadcast %440 : vector<1x128xf32> to vector<32x128xf32>
    %443 = vector.broadcast %441 : vector<32x1xf32> to vector<32x128xf32>
    %444 = arith.addf %442, %443 : vector<32x128xf32>
    %445 = vector.broadcast %438 : f32 to vector<32x128xf32>
    %446 = arith.mulf %445, %0 : vector<32x128xf32>
    %447 = arith.addf %444, %446 : vector<32x128xf32>
    %448 = math.absf %447 : vector<32x128xf32>
    %449 = vector.broadcast %439 : f32 to vector<32x128xf32>
    %450 = arith.mulf %449, %448 : vector<32x128xf32>
    %451 = arith.addf %437, %450 : vector<32x128xf32>
    %c0_102 = arith.constant 0 : index
    %c0_103 = arith.constant 0 : index
    %452 = vector.load %arg4[%c0_102, %c0_103] : memref<1x128xf32, #tpu.memory_space<vmem>>, vector<1x128xf32>
    %c0_104 = arith.constant 0 : index
    %c0_105 = arith.constant 0 : index
    %453 = vector.load %arg5[%c0_104, %c0_105] : memref<32x1xf32, #tpu.memory_space<vmem>>, vector<32x1xf32>
    %454 = vector.broadcast %452 : vector<1x128xf32> to vector<32x128xf32>
    %455 = vector.broadcast %453 : vector<32x1xf32> to vector<32x128xf32>
    %456 = arith.addf %454, %455 : vector<32x128xf32>
    %c0_106 = arith.constant 0 : index
    %c0_107 = arith.constant 0 : index
    %457 = memref.load %arg10[%c0_106, %c0_107] : memref<1x1xf32, #tpu.memory_space<smem>>
    %458 = vector.broadcast %457 : f32 to vector<32x128xf32>
    %459 = arith.mulf %458, %0 : vector<32x128xf32>
    %460 = arith.addf %456, %459 : vector<32x128xf32>
    %461 = arith.addf %460, %451 : vector<32x128xf32>
    %c0_108 = arith.constant 0 : index
    %c0_109 = arith.constant 0 : index
    %462 = vector.load %arg6[%c0_108, %c0_109] : memref<32x128xbf16, #tpu.memory_space<vmem>>, vector<32x128xbf16>
    %463 = arith.extf %462 : vector<32x128xbf16> to vector<32x128xf32>
    %464 = arith.addf %461, %463 : vector<32x128xf32>
    %cst_110 = arith.constant dense<0xFF800000> : vector<32xf32>
    %465 = vector.multi_reduction <maximumf>, %464, %cst_110 [1] : vector<32x128xf32> to vector<32xf32>
    %466 = vector.shape_cast %465 : vector<32xf32> to vector<32x1xf32>
    %467 = vector.broadcast %466 : vector<32x1xf32> to vector<32x128xf32>
    %468 = arith.subf %464, %467 : vector<32x128xf32>
    %469 = math.exp %468 : vector<32x128xf32>
    %cst_111 = arith.constant dense<0.000000e+00> : vector<32xf32>
    %470 = vector.multi_reduction <add>, %469, %cst_111 [1] : vector<32x128xf32> to vector<32xf32>
    %471 = vector.shape_cast %470 : vector<32xf32> to vector<32x1xf32>
    %472 = tpu.reciprocal %471 : vector<32x1xf32> -> vector<32x1xf32>
    %473 = vector.broadcast %472 : vector<32x1xf32> to vector<32x128xf32>
    %474 = arith.mulf %469, %473 : vector<32x128xf32>
    %c0_112 = arith.constant 0 : index
    %c0_113 = arith.constant 0 : index
    %475 = vector.load %arg12[%c0_112, %c0_113] : memref<32x128xf32, #tpu.memory_space<vmem>>, vector<32x128xf32>
    tpu.vector_store %arg12[%c0_112, %c0_113], %474 {strides = array<i32>} : memref<32x128xf32, #tpu.memory_space<vmem>>, vector<32x128xf32>,
    %c0_114 = arith.constant 0 : index
    %c0_115 = arith.constant 0 : index
    %476 = vector.load %arg2[%c0_114, %c0_115] : memref<128x32xf32, #tpu.memory_space<vmem>>, vector<128x32xf32>
    %cst_116 = arith.constant dense<0.000000e+00> : vector<32x32xf32>
    %477 = tpu.matmul %474, %476, %cst_116 {dimension_numbers = #tpu.dot_dimension_numbers<[1], [0], [0], [1], [0, 0, 1, 1], [], []>} : vector<32x128xf32>, vector<128x32xf32>, vector<32x32xf32> -> vector<32x32xf32>
    %c0_117 = arith.constant 0 : index
    %c0_118 = arith.constant 0 : index
    %478 = vector.load %arg11[%c0_117, %c0_118] : memref<1x32xf32, #tpu.memory_space<vmem>>, vector<1x32xf32>
    %479 = vector.broadcast %478 : vector<1x32xf32> to vector<32x32xf32>
    %480 = arith.addf %477, %479 : vector<32x32xf32>
    %cst_119 = arith.constant 0.000000e+00 : f32
    %481 = vector.broadcast %cst_119 : f32 to vector<32x32xf32>
    %482 = arith.maximumf %480, %481 : vector<32x32xf32>
    %c0_120 = arith.constant 0 : index
    %c0_121 = arith.constant 0 : index
    %483 = vector.load %arg13[%c0_120, %c0_121] : memref<32x32xf32, #tpu.memory_space<vmem>>, vector<32x32xf32>
    tpu.vector_store %arg13[%c0_120, %c0_121], %482 {strides = array<i32>} : memref<32x32xf32, #tpu.memory_space<vmem>>, vector<32x32xf32>,
    return
  }
  func.func @transform_0(%arg0: i32) -> (i32, i32) {
    %c0_i32 = arith.constant 0 : i32
    %c0_i32_0 = arith.constant 0 : i32
    %c0_i32_1 = arith.constant 0 : i32
    return %c0_i32, %c0_i32_0 : i32, i32
  }
  func.func @transform_1(%arg0: i32) -> (i32, i32) {
    %c0_i32 = arith.constant 0 : i32
    %c0_i32_0 = arith.constant 0 : i32
    %c0_i32_1 = arith.constant 0 : i32
    return %c0_i32, %c0_i32_0 : i32, i32
  }
  func.func @transform_2(%arg0: i32) -> (i32, i32) {
    %c0_i32 = arith.constant 0 : i32
    %c0_i32_0 = arith.constant 0 : i32
    return %arg0, %c0_i32 : i32, i32
  }
  func.func @transform_3(%arg0: i32) -> (i32, i32) {
    %c0_i32 = arith.constant 0 : i32
    %c0_i32_0 = arith.constant 0 : i32
    %c0_i32_1 = arith.constant 0 : i32
    return %c0_i32, %c0_i32_0 : i32, i32
  }
  func.func @transform_4(%arg0: i32) -> (i32, i32) {
    %c0_i32 = arith.constant 0 : i32
    %c0_i32_0 = arith.constant 0 : i32
    return %arg0, %c0_i32 : i32, i32
  }
  func.func @transform_5(%arg0: i32) -> (i32, i32) {
    %c0_i32 = arith.constant 0 : i32
    %c0_i32_0 = arith.constant 0 : i32
    return %arg0, %c0_i32 : i32, i32
  }
  func.func @transform_6(%arg0: i32) -> (i32, i32) {
    %c0_i32 = arith.constant 0 : i32
    %c0_i32_0 = arith.constant 0 : i32
    return %arg0, %c0_i32 : i32, i32
  }
  func.func @transform_7(%arg0: i32) -> (i32, i32) {
    %c0_i32 = arith.constant 0 : i32
    %c0_i32_0 = arith.constant 0 : i32
    %c0_i32_1 = arith.constant 0 : i32
    return %c0_i32, %c0_i32_0 : i32, i32
  }
  func.func @transform_8(%arg0: i32) -> (i32, i32) {
    %c0_i32 = arith.constant 0 : i32
    %c0_i32_0 = arith.constant 0 : i32
    %c0_i32_1 = arith.constant 0 : i32
    return %c0_i32, %c0_i32_0 : i32, i32
  }
  func.func @transform_9(%arg0: i32) -> (i32, i32) {
    %c0_i32 = arith.constant 0 : i32
    %c0_i32_0 = arith.constant 0 : i32
    %c0_i32_1 = arith.constant 0 : i32
    return %c0_i32, %c0_i32_0 : i32, i32
  }
  func.func @transform_10(%arg0: i32) -> (i32, i32) {
    %c0_i32 = arith.constant 0 : i32
    %c0_i32_0 = arith.constant 0 : i32
    %c0_i32_1 = arith.constant 0 : i32
    return %c0_i32, %c0_i32_0 : i32, i32
  }
  func.func @transform_11(%arg0: i32) -> (i32, i32) {
    %c0_i32 = arith.constant 0 : i32
    %c0_i32_0 = arith.constant 0 : i32
    return %arg0, %c0_i32 : i32, i32
  }
  func.func @transform_12(%arg0: i32) -> (i32, i32) {
    %c0_i32 = arith.constant 0 : i32
    %c0_i32_0 = arith.constant 0 : i32
    return %arg0, %c0_i32 : i32, i32
  }
}

</mosaic_0001>

<llo_original>
// kernel: tpu_custom_call.1
$region0: #{tpu_custom_call.1}
  #allocation0 [shape = 'u32[]', space=smem, size = 0x4, offset = 0x4, fixed_abs, tag = 'smem constant byte address 0x4 - core index']
  #allocation1 [shape = 'u32[144,128]{1,0:T(1,128)}', space=vmem, size = 0x12000, scoped, tag = 'internal scratch']
  #allocation2 [shape = 'f32[1,1]{1,0:T(1,128)S(6)}', space=smem, size = 0x200, scoped, tag = 'scoped memory for tpu_custom_call.1']
  %s0 = inlined_call_operand.vmem [shape: f32[32,128], index: 0, kind: input, shape index: {}]
  %s1 = inlined_call_operand.vmem [shape: f32[128,32], index: 1, kind: input, shape index: {}]
  %s2 = inlined_call_operand.vmem [shape: f32[128,32], index: 2, kind: input, shape index: {}]
  %s3 = inlined_call_operand.vmem [shape: f32[1,128], index: 3, kind: input, shape index: {}]
  %s4 = inlined_call_operand.vmem [shape: f32[128,1], index: 4, kind: input, shape index: {}]
  %s5 = inlined_call_operand.vmem [shape: bf16[128,128], index: 5, kind: input, shape index: {}]
  %s6 = inlined_call_operand.vmem [shape: f32[128,128], index: 6, kind: input, shape index: {}]
  %s7 = inlined_call_operand.vmem [shape: f32[1,32], index: 7, kind: input, shape index: {}]
  %s8 = inlined_call_operand.vmem [shape: f32[1,32], index: 8, kind: input, shape index: {}]
  %s9 = inlined_call_operand.<no memory space> [shape: f32[1,1], index: 9, kind: input, shape index: {}]
  %s10 = inlined_call_operand.vmem [shape: f32[1,32], index: 10, kind: input, shape index: {}]
  %s11 = inlined_call_operand.hbm [shape: f32[128,128], index: 11, kind: output, shape index: {0}]
  %s12 = inlined_call_operand.vmem [shape: f32[128,32], index: 12, kind: output, shape index: {1}]
  %13 = xla_tuple %s11, %s12
  %s14 = sld [smem:[#allocation0]]
  $region93: #{tpu_custom_call.1} parent=0
    _
  %s16 = ssub.s32 1, %s14
  %s17 = scalar_select 0, %s16, %s14
  %18 = sst [smem:[#allocation2]] %s9
  $region1: #{tpu_custom_call.1} parent=0
    #allocation3 [shape = 'u8[512]{0}', space=smem, size = 0x200, scoped, tag = 'input window, operand 7, single buffered']
    #allocation4 [shape = 's32[2]{0}', space=sflag, size = 0x8, scoped, tag = 'scoped memory for tpu_custom_call.1']
    #allocation5 [shape = 's32[2]{0}', space=sflag, size = 0x8, scoped, tag = 'scoped memory for tpu_custom_call.1']
    #allocation6 [shape = 'u8[512]{0}', space=smem, size = 0x200, scoped, tag = 'input window, operand 8, single buffered']
    #allocation7 [shape = 's32[1]{0}', space=sflag, size = 0x4, scoped, tag = 'scoped memory for tpu_custom_call.1']
    #allocation8 [shape = 'u8[32768]{0}', space=vmem, size = 0x8000, scoped, tag = 'output window, operand 0']
    %19 = vsyncpa [#allocation5], 0
    %20 = vsyncpa [#allocation7], 0
    %21 = vsyncpa [#allocation4], 0
    %s22 = scalar_lea.sflag [#allocation4], 1
    %23 = vsyncpa %s22, 0
    loop: start=0, step=1, limit=6
    $region2: #{tpu_custom_call.1} parent=1 // loop_pre_header
      _
    $region3: #{tpu_custom_call.1} parent=1 // loop_header
      %s25 = sphi 0, %s29
      %p26 = scmp.ge.s32.totalorder %s25, 6
      %s33 = sphi 0, %s33
      %s35 = sphi 0, %s33
      %s36 = sphi 0, %s35
      %s50 = sphi 0, %s36
      %s54 = sphi 0, %s54
      %s56 = sphi 0, %s54
      %s57 = sphi 0, %s56
      %s71 = sphi 0, %s57
      %s77 = sphi 0, %s79
      %s80 = sphi 0, %s77
      %s81 = sphi 0, %s80
      %s97 = sphi 0, %s81
      %s101 = sphi 0, %s101
      %s103 = sphi 0, %s101
      %s104 = sphi 0, %s103
      %s118 = sphi 0, %s104
      %s124 = sphi 0, %s126
      %s127 = sphi 0, %s124
      %s128 = sphi 0, %s127
      %s144 = sphi 0, %s128
      %s150 = sphi 0, %s152
      %s153 = sphi 0, %s150
      %s154 = sphi 0, %s153
      %s170 = sphi 0, %s154
      %s176 = sphi 0, %s178
      %s179 = sphi 0, %s176
      %s180 = sphi 0, %s179
      %s196 = sphi 0, %s180
      %s200 = sphi 0, %s200
      %s202 = sphi 0, %s200
      %s203 = sphi 0, %s202
      %s217 = sphi 0, %s203
      %s221 = sphi 0, %s221
      %s223 = sphi 0, %s221
      %s224 = sphi 0, %s223
      %s238 = sphi 0, %s224
      %s242 = sphi 0, %s242
      %s244 = sphi 0, %s242
      %s245 = sphi 0, %s244
      %s259 = sphi 0, %s245
      %s263 = sphi 0, %s263
      %s265 = sphi 0, %s263
      %s266 = sphi 0, %s265
      %s280 = sphi 0, %s266
      %s286 = sphi 0, %s288
      %s289 = sphi 0, %s286
      %s290 = sphi 0, %s289
      %s306 = sphi 0, %s290
      %s312 = sphi 0, %s314
      %s315 = sphi 0, %s312
      %s316 = sphi 0, %s315
      %s332 = sphi 0, %s316
    $region4: #{tpu_custom_call.1} parent=1 // loop_header_branch
      %28 = sbr.rel (%p26) target = $region8
    $region5: #{tpu_custom_call.1} parent=1 // loop_body
      %s30 = ssub.s32 %s25, 1
      %s31 = ssub.s32 %s25, 2
      %s32 = sadd.s32 %s25, 1
      %s34 = sadd.s32 %s33, 1
      %p37 = scmp.eq.s32.totalorder %s25, 3
      %p38 = scmp.ne.s32.totalorder %s33, %s35
      %p39 = scmp.eq.s32.totalorder %s25, 0
      %p40 = por %p38, %p39
      %p41 = scmp.ne.s32.totalorder %s33, %s35
      %p42 = scmp.eq.s32.totalorder %s30, 3
      %p43 = por %p41, %p42
      %p44 = scmp.ne.s32.totalorder %s35, %s36
      %p45 = scmp.eq.s32.totalorder %s30, 0
      %p46 = por %p44, %p45
      %p47 = scmp.ne.s32.totalorder %s35, %s36
      %p48 = scmp.eq.s32.totalorder %s31, 3
      %p49 = por %p47, %p48
      %p51 = scmp.ne.s32.totalorder %s36, %s50
      %p52 = scmp.eq.s32.totalorder %s31, 0
      %p53 = por %p51, %p52
      %s55 = sadd.s32 %s54, 1
      %p58 = scmp.eq.s32.totalorder %s25, 3
      %p59 = scmp.ne.s32.totalorder %s54, %s56
      %p60 = scmp.eq.s32.totalorder %s25, 0
      %p61 = por %p59, %p60
      %p62 = scmp.ne.s32.totalorder %s54, %s56
      %p63 = scmp.eq.s32.totalorder %s30, 3
      %p64 = por %p62, %p63
      %p65 = scmp.ne.s32.totalorder %s56, %s57
      %p66 = scmp.eq.s32.totalorder %s30, 0
      %p67 = por %p65, %p66
      %p68 = scmp.ne.s32.totalorder %s56, %s57
      %p69 = scmp.eq.s32.totalorder %s31, 3
      %p70 = por %p68, %p69
      %p72 = scmp.ne.s32.totalorder %s57, %s71
      %p73 = scmp.eq.s32.totalorder %s31, 0
      %p74 = por %p72, %p73
      %s75 = ssub.s32 %s25, %s32
      %p76 = scmp.eq.s32.totalorder %s75, 0
      %s78 = sadd.s32 %s77, 1
      %s79 = scalar_select %p76, %s77, %s78
      %p82 = pneg %p76
      %p83 = scmp.eq.s32.totalorder %s25, 3
      %p84 = por %p82, %p83
      %p85 = scmp.ne.s32.totalorder %s77, %s80
      %p86 = scmp.eq.s32.totalorder %s25, 0
      %p87 = por %p85, %p86
      %p88 = scmp.ne.s32.totalorder %s77, %s80
      %p89 = scmp.eq.s32.totalorder %s30, 3
      %p90 = por %p88, %p89
      %p91 = scmp.ne.s32.totalorder %s80, %s81
      %p92 = scmp.eq.s32.totalorder %s30, 0
      %p93 = por %p91, %p92
      %p94 = scmp.ne.s32.totalorder %s80, %s81
      %p95 = scmp.eq.s32.totalorder %s31, 3
      %p96 = por %p94, %p95
      %p98 = scmp.ne.s32.totalorder %s81, %s97
      %p99 = scmp.eq.s32.totalorder %s31, 0
      %p100 = por %p98, %p99
      %s102 = sadd.s32 %s101, 1
      %p105 = scmp.eq.s32.totalorder %s25, 3
      %p106 = scmp.ne.s32.totalorder %s101, %s103
      %p107 = scmp.eq.s32.totalorder %s25, 0
      %p108 = por %p106, %p107
      %p109 = scmp.ne.s32.totalorder %s101, %s103
      %p110 = scmp.eq.s32.totalorder %s30, 3
      %p111 = por %p109, %p110
      %p112 = scmp.ne.s32.totalorder %s103, %s104
      %p113 = scmp.eq.s32.totalorder %s30, 0
      %p114 = por %p112, %p113
      %p115 = scmp.ne.s32.totalorder %s103, %s104
      %p116 = scmp.eq.s32.totalorder %s31, 3
      %p117 = por %p115, %p116
      %p119 = scmp.ne.s32.totalorder %s104, %s118
      %p120 = scmp.eq.s32.totalorder %s31, 0
      %p121 = por %p119, %p120
      %s122 = ssub.s32 %s25, %s32
      %p123 = scmp.eq.s32.totalorder %s122, 0
      %s125 = sadd.s32 %s124, 1
      %s126 = scalar_select %p123, %s124, %s125
      %p129 = pneg %p123
      %p130 = scmp.eq.s32.totalorder %s25, 3
      %p131 = por %p129, %p130
      %p132 = scmp.ne.s32.totalorder %s124, %s127
      %p133 = scmp.eq.s32.totalorder %s25, 0
      %p134 = por %p132, %p133
      %p135 = scmp.ne.s32.totalorder %s124, %s127
      %p136 = scmp.eq.s32.totalorder %s30, 3
      %p137 = por %p135, %p136
      %p138 = scmp.ne.s32.totalorder %s127, %s128
      %p139 = scmp.eq.s32.totalorder %s30, 0
      %p140 = por %p138, %p139
      %p141 = scmp.ne.s32.totalorder %s127, %s128
      %p142 = scmp.eq.s32.totalorder %s31, 3
      %p143 = por %p141, %p142
      %p145 = scmp.ne.s32.totalorder %s128, %s144
      %p146 = scmp.eq.s32.totalorder %s31, 0
      %p147 = por %p145, %p146
      %s148 = ssub.s32 %s25, %s32
      %p149 = scmp.eq.s32.totalorder %s148, 0
      %s151 = sadd.s32 %s150, 1
      %s152 = scalar_select %p149, %s150, %s151
      %p155 = pneg %p149
      %p156 = scmp.eq.s32.totalorder %s25, 3
      %p157 = por %p155, %p156
      %p158 = scmp.ne.s32.totalorder %s150, %s153
      %p159 = scmp.eq.s32.totalorder %s25, 0
      %p160 = por %p158, %p159
      %p161 = scmp.ne.s32.totalorder %s150, %s153
      %p162 = scmp.eq.s32.totalorder %s30, 3
      %p163 = por %p161, %p162
      %p164 = scmp.ne.s32.totalorder %s153, %s154
      %p165 = scmp.eq.s32.totalorder %s30, 0
      %p166 = por %p164, %p165
      %p167 = scmp.ne.s32.totalorder %s153, %s154
      %p168 = scmp.eq.s32.totalorder %s31, 3
      %p169 = por %p167, %p168
      %p171 = scmp.ne.s32.totalorder %s154, %s170
      %p172 = scmp.eq.s32.totalorder %s31, 0
      %p173 = por %p171, %p172
      %s174 = ssub.s32 %s25, %s32
      %p175 = scmp.eq.s32.totalorder %s174, 0
      %s177 = sadd.s32 %s176, 1
      %s178 = scalar_select %p175, %s176, %s177
      %p181 = pneg %p175
      %p182 = scmp.eq.s32.totalorder %s25, 3
      %p183 = por %p181, %p182
      %p184 = scmp.ne.s32.totalorder %s176, %s179
      %p185 = scmp.eq.s32.totalorder %s25, 0
      %p186 = por %p184, %p185
      %p187 = scmp.ne.s32.totalorder %s176, %s179
      %p188 = scmp.eq.s32.totalorder %s30, 3
      %p189 = por %p187, %p188
      %p190 = scmp.ne.s32.totalorder %s179, %s180
      %p191 = scmp.eq.s32.totalorder %s30, 0
      %p192 = por %p190, %p191
      %p193 = scmp.ne.s32.totalorder %s179, %s180
      %p194 = scmp.eq.s32.totalorder %s31, 3
      %p195 = por %p193, %p194
      %p197 = scmp.ne.s32.totalorder %s180, %s196
      %p198 = scmp.eq.s32.totalorder %s31, 0
      %p199 = por %p197, %p198
      %s201 = sadd.s32 %s200, 1
      %p204 = scmp.eq.s32.totalorder %s25, 3
      %p205 = scmp.ne.s32.totalorder %s200, %s202
      %p206 = scmp.eq.s32.totalorder %s25, 0
      %p207 = por %p205, %p206
      %p208 = scmp.ne.s32.totalorder %s200, %s202
      %p209 = scmp.eq.s32.totalorder %s30, 3
      %p210 = por %p208, %p209
      %p211 = scmp.ne.s32.totalorder %s202, %s203
      %p212 = scmp.eq.s32.totalorder %s30, 0
      %p213 = por %p211, %p212
      %p214 = scmp.ne.s32.totalorder %s202, %s203
      %p215 = scmp.eq.s32.totalorder %s31, 3
      %p216 = por %p214, %p215
      %p218 = scmp.ne.s32.totalorder %s203, %s217
      %p219 = scmp.eq.s32.totalorder %s31, 0
      %p220 = por %p218, %p219
      %s222 = sadd.s32 %s221, 1
      %p225 = scmp.eq.s32.totalorder %s25, 3
      %p226 = scmp.ne.s32.totalorder %s221, %s223
      %p227 = scmp.eq.s32.totalorder %s25, 0
      %p228 = por %p226, %p227
      %p229 = scmp.ne.s32.totalorder %s221, %s223
      %p230 = scmp.eq.s32.totalorder %s30, 3
      %p231 = por %p229, %p230
      %p232 = scmp.ne.s32.totalorder %s223, %s224
      %p233 = scmp.eq.s32.totalorder %s30, 0
      %p234 = por %p232, %p233
      %p235 = scmp.ne.s32.totalorder %s223, %s224
      %p236 = scmp.eq.s32.totalorder %s31, 3
      %p237 = por %p235, %p236
      %p239 = scmp.ne.s32.totalorder %s224, %s238
      %p240 = scmp.eq.s32.totalorder %s31, 0
      %p241 = por %p239, %p240
      %s243 = sadd.s32 %s242, 1
      %p246 = scmp.eq.s32.totalorder %s25, 3
      %p247 = scmp.ne.s32.totalorder %s242, %s244
      %p248 = scmp.eq.s32.totalorder %s25, 0
      %p249 = por %p247, %p248
      %p250 = scmp.ne.s32.totalorder %s242, %s244
      %p251 = scmp.eq.s32.totalorder %s30, 3
      %p252 = por %p250, %p251
      %p253 = scmp.ne.s32.totalorder %s244, %s245
      %p254 = scmp.eq.s32.totalorder %s30, 0
      %p255 = por %p253, %p254
      %p256 = scmp.ne.s32.totalorder %s244, %s245
      %p257 = scmp.eq.s32.totalorder %s31, 3
      %p258 = por %p256, %p257
      %p260 = scmp.ne.s32.totalorder %s245, %s259
      %p261 = scmp.eq.s32.totalorder %s31, 0
      %p262 = por %p260, %p261
      %s264 = sadd.s32 %s263, 1
      %p267 = scmp.eq.s32.totalorder %s25, 3
      %p268 = scmp.ne.s32.totalorder %s263, %s265
      %p269 = scmp.eq.s32.totalorder %s25, 0
      %p270 = por %p268, %p269
      %p271 = scmp.ne.s32.totalorder %s263, %s265
      %p272 = scmp.eq.s32.totalorder %s30, 3
      %p273 = por %p271, %p272
      %p274 = scmp.ne.s32.totalorder %s265, %s266
      %p275 = scmp.eq.s32.totalorder %s30, 0
      %p276 = por %p274, %p275
      %p277 = scmp.ne.s32.totalorder %s265, %s266
      %p278 = scmp.eq.s32.totalorder %s31, 3
      %p279 = por %p277, %p278
      %p281 = scmp.ne.s32.totalorder %s266, %s280
      %p282 = scmp.eq.s32.totalorder %s31, 0
      %p283 = por %p281, %p282
      %s284 = ssub.s32 %s25, %s32
      %p285 = scmp.eq.s32.totalorder %s284, 0
      %s287 = sadd.s32 %s286, 1
      %s288 = scalar_select %p285, %s286, %s287
      %p291 = pneg %p285
      %p292 = scmp.eq.s32.totalorder %s25, 3
      %p293 = por %p291, %p292
      %p294 = scmp.ne.s32.totalorder %s286, %s289
      %p295 = scmp.eq.s32.totalorder %s25, 0
      %p296 = por %p294, %p295
      %p297 = scmp.ne.s32.totalorder %s286, %s289
      %p298 = scmp.eq.s32.totalorder %s30, 3
      %p299 = por %p297, %p298
      %p300 = scmp.ne.s32.totalorder %s289, %s290
      %p301 = scmp.eq.s32.totalorder %s30, 0
      %p302 = por %p300, %p301
      %p303 = scmp.ne.s32.totalorder %s289, %s290
      %p304 = scmp.eq.s32.totalorder %s31, 3
      %p305 = por %p303, %p304
      %p307 = scmp.ne.s32.totalorder %s290, %s306
      %p308 = scmp.eq.s32.totalorder %s31, 0
      %p309 = por %p307, %p308
      %s310 = ssub.s32 %s25, %s32
      %p311 = scmp.eq.s32.totalorder %s310, 0
      %s313 = sadd.s32 %s312, 1
      %s314 = scalar_select %p311, %s312, %s313
      %p317 = pneg %p311
      %p318 = scmp.eq.s32.totalorder %s25, 3
      %p319 = por %p317, %p318
      %p320 = scmp.ne.s32.totalorder %s312, %s315
      %p321 = scmp.eq.s32.totalorder %s25, 0
      %p322 = por %p320, %p321
      %p323 = scmp.ne.s32.totalorder %s312, %s315
      %p324 = scmp.eq.s32.totalorder %s30, 3
      %p325 = por %p323, %p324
      %p326 = scmp.ne.s32.totalorder %s315, %s316
      %p327 = scmp.eq.s32.totalorder %s30, 0
      %p328 = por %p326, %p327
      %p329 = scmp.ne.s32.totalorder %s315, %s316
      %p330 = scmp.eq.s32.totalorder %s31, 3
      %p331 = por %p329, %p330
      %p333 = scmp.ne.s32.totalorder %s316, %s332
      %p334 = scmp.eq.s32.totalorder %s31, 0
      %p335 = por %p333, %p334
      %p336 = scmp.le.s32.totalorder 1, %s25
      %p337 = scmp.lt.s32.totalorder %s25, 5
      %p338 = pnand %p336, %p337
      %p339 = pneg %p338
      // Predicated region
      $region9: #{tpu_custom_call.1} parent=5 // pred_check
        _
      $region10: #{tpu_custom_call.1} parent=5 // pred_check_branch
        %341 = sbr.rel (%p338) target = $region12
      $region11: #{tpu_custom_call.1} parent=5 // pred_region
        %s342 = ssub.s32 %s25, 1
        // Predicated region
        $region13: #{tpu_custom_call.1} parent=11 // pred_check
          %p343 = pneg %p46
        $region14: #{tpu_custom_call.1} parent=11 // pred_check_branch
          %345 = sbr.rel (%p343) target = $region16
        $region15: #{tpu_custom_call.1} parent=11 // pred_region
          _
        $region16: #{tpu_custom_call.1} parent=11 // pred_fallthru
          _
        // Predicated region
        $region17: #{tpu_custom_call.1} parent=11 // pred_check
          %p346 = pneg %p67
        $region18: #{tpu_custom_call.1} parent=11 // pred_check_branch
          %348 = sbr.rel (%p346) target = $region20
        $region19: #{tpu_custom_call.1} parent=11 // pred_region
          _
        $region20: #{tpu_custom_call.1} parent=11 // pred_fallthru
          _
        // Predicated region
        $region21: #{tpu_custom_call.1} parent=11 // pred_check
          %p349 = pneg %p114
        $region22: #{tpu_custom_call.1} parent=11 // pred_check_branch
          %351 = sbr.rel (%p349) target = $region24
        $region23: #{tpu_custom_call.1} parent=11 // pred_region
          _
        $region24: #{tpu_custom_call.1} parent=11 // pred_fallthru
          _
        // Predicated region
        $region25: #{tpu_custom_call.1} parent=11 // pred_check
          %p352 = pneg %p213
        $region26: #{tpu_custom_call.1} parent=11 // pred_check_branch
          %354 = sbr.rel (%p352) target = $region28
        $region27: #{tpu_custom_call.1} parent=11 // pred_region
          %s356 = ssub.s32 16, 16
          %357 = vsyncadd [#allocation5], %s356
          %s359 = sshll.u32 %s7, 4
          %s360 = int_to_ptr.vmem [resolvable:$true] %s359
          %362 = dma.vmem_to_smem %s360, 16, [#allocation3], [#allocation5]
        $region28: #{tpu_custom_call.1} parent=11 // pred_fallthru
          _
        // Predicated region
        $region29: #{tpu_custom_call.1} parent=11 // pred_check
          %p363 = pneg %p234
        $region30: #{tpu_custom_call.1} parent=11 // pred_check_branch
          %365 = sbr.rel (%p363) target = $region32
        $region31: #{tpu_custom_call.1} parent=11 // pred_region
          %s367 = ssub.s32 16, 16
          %368 = vsyncadd [#allocation7], %s367
          %s370 = sshll.u32 %s8, 4
          %s371 = int_to_ptr.vmem [resolvable:$true] %s370
          %373 = dma.vmem_to_smem %s371, 16, [#allocation6], [#allocation7]
        $region32: #{tpu_custom_call.1} parent=11 // pred_fallthru
          _
        // Predicated region
        $region33: #{tpu_custom_call.1} parent=11 // pred_check
          %p374 = pneg %p255
        $region34: #{tpu_custom_call.1} parent=11 // pred_check_branch
          %376 = sbr.rel (%p374) target = $region36
        $region35: #{tpu_custom_call.1} parent=11 // pred_region
          _
        $region36: #{tpu_custom_call.1} parent=11 // pred_fallthru
          _
        // Predicated region
        $region37: #{tpu_custom_call.1} parent=11 // pred_check
          %p377 = pneg %p276
        $region38: #{tpu_custom_call.1} parent=11 // pred_check_branch
          %379 = sbr.rel (%p377) target = $region40
        $region39: #{tpu_custom_call.1} parent=11 // pred_region
          _
        $region40: #{tpu_custom_call.1} parent=11 // pred_fallthru
          _
      $region12: #{tpu_custom_call.1} parent=5 // pred_fallthru
        _
      %p380 = scmp.lt.s32.totalorder %s25, 4
      // Predicated region
      $region41: #{tpu_custom_call.1} parent=5 // pred_check
        %p381 = pneg %p380
      $region42: #{tpu_custom_call.1} parent=5 // pred_check_branch
        %383 = sbr.rel (%p381) target = $region44
      $region43: #{tpu_custom_call.1} parent=5 // pred_region
        // Predicated region
        $region45: #{tpu_custom_call.1} parent=43 // pred_check
          %p384 = pneg %p87
        $region46: #{tpu_custom_call.1} parent=43 // pred_check_branch
          %386 = sbr.rel (%p384) target = $region48
        $region47: #{tpu_custom_call.1} parent=43 // pred_region
          %s387 = smul.u32 4, %s25
          %p388 = scmp.lt.s32.totalorder %s387, 15
          %s389 = scalar_select %p388, %s387, 15
          %s390 = smul.addr %s389, 8
          %s391 = scalar_lea.vmem %s2, %s390
          %s392 = smul.u32 4, %s25
        $region48: #{tpu_custom_call.1} parent=43 // pred_fallthru
          _
        // Predicated region
        $region49: #{tpu_custom_call.1} parent=43 // pred_check
          %p393 = pneg %p134
        $region50: #{tpu_custom_call.1} parent=43 // pred_check_branch
          %395 = sbr.rel (%p393) target = $region52
        $region51: #{tpu_custom_call.1} parent=43 // pred_region
          %s396 = smul.u32 4, %s25
          %p397 = scmp.lt.s32.totalorder %s396, 15
          %s398 = scalar_select %p397, %s396, 15
          %s399 = smul.addr %s398, 8
          %s400 = scalar_lea.vmem %s4, %s399
          %s401 = smul.u32 4, %s25
        $region52: #{tpu_custom_call.1} parent=43 // pred_fallthru
          _
        // Predicated region
        $region53: #{tpu_custom_call.1} parent=43 // pred_check
          %p402 = pneg %p160
        $region54: #{tpu_custom_call.1} parent=43 // pred_check_branch
          %404 = sbr.rel (%p402) target = $region56
        $region55: #{tpu_custom_call.1} parent=43 // pred_region
          %s405 = smul.u32 4, %s25
          %p406 = scmp.lt.s32.totalorder %s405, 15
          %s407 = scalar_select %p406, %s405, 15
          %s408 = smul.addr %s407, 4
          %s409 = scalar_lea.vmem %s5, %s408
          %s410 = smul.u32 4, %s25
        $region56: #{tpu_custom_call.1} parent=43 // pred_fallthru
          _
        // Predicated region
        $region57: #{tpu_custom_call.1} parent=43 // pred_check
          %p411 = pneg %p186
        $region58: #{tpu_custom_call.1} parent=43 // pred_check_branch
          %413 = sbr.rel (%p411) target = $region60
        $region59: #{tpu_custom_call.1} parent=43 // pred_region
          %s414 = smul.u32 4, %s25
          %p415 = scmp.lt.s32.totalorder %s414, 15
          %s416 = scalar_select %p415, %s414, 15
          %s417 = smul.addr %s416, 8
          %s418 = scalar_lea.vmem %s6, %s417
          %s419 = smul.u32 4, %s25
        $region60: #{tpu_custom_call.1} parent=43 // pred_fallthru
          _
      $region44: #{tpu_custom_call.1} parent=5 // pred_fallthru
        _
      %p420 = scmp.le.s32.totalorder 1, %s25
      %p421 = scmp.lt.s32.totalorder %s25, 5
      %p422 = pnand %p420, %p421
      %p423 = pneg %p422
      // Predicated region
      $region61: #{tpu_custom_call.1} parent=5 // pred_check
        _
      $region62: #{tpu_custom_call.1} parent=5 // pred_check_branch
        %425 = sbr.rel (%p422) target = $region64
      $region63: #{tpu_custom_call.1} parent=5 // pred_region
        %s426 = ssub.s32 %s25, 1
        // Predicated region
        $region65: #{tpu_custom_call.1} parent=63 // pred_check
          %p427 = pneg %p213
        $region66: #{tpu_custom_call.1} parent=63 // pred_check_branch
          %429 = sbr.rel (%p427) target = $region68
        $region67: #{tpu_custom_call.1} parent=63 // pred_region
          %430 = dma.done [#allocation5], 16
        $region68: #{tpu_custom_call.1} parent=63 // pred_fallthru
          _
        // Predicated region
        $region69: #{tpu_custom_call.1} parent=63 // pred_check
          %p431 = pneg %p234
        $region70: #{tpu_custom_call.1} parent=63 // pred_check_branch
          %433 = sbr.rel (%p431) target = $region72
        $region71: #{tpu_custom_call.1} parent=63 // pred_region
          %434 = dma.done [#allocation7], 16
        $region72: #{tpu_custom_call.1} parent=63 // pred_fallthru
          _
        %435 = sfence
        %p436 = pneg %p46
        %p437 = pneg %p43
        %p438 = pneg %p67
        %p439 = pneg %p64
        %s440 = smul.u32 4, %s30
        %p441 = scmp.lt.s32.totalorder %s440, 15
        %s442 = scalar_select %p441, %s440, 15
        %s443 = smul.addr %s442, 8
        %s444 = scalar_lea.vmem %s2, %s443
        %p445 = pneg %p93
        %p446 = pneg %p90
        %p447 = pneg %p114
        %p448 = pneg %p111
        %s449 = smul.u32 4, %s30
        %p450 = scmp.lt.s32.totalorder %s449, 15
        %s451 = scalar_select %p450, %s449, 15
        %s452 = smul.addr %s451, 8
        %s453 = scalar_lea.vmem %s4, %s452
        %p454 = pneg %p140
        %p455 = pneg %p137
        %s456 = smul.u32 4, %s30
        %p457 = scmp.lt.s32.totalorder %s456, 15
        %s458 = scalar_select %p457, %s456, 15
        %s459 = smul.addr %s458, 4
        %s460 = scalar_lea.vmem %s5, %s459
        %p461 = pneg %p166
        %p462 = pneg %p163
        %s463 = smul.u32 4, %s30
        %p464 = scmp.lt.s32.totalorder %s463, 15
        %s465 = scalar_select %p464, %s463, 15
        %s466 = smul.addr %s465, 8
        %s467 = scalar_lea.vmem %s6, %s466
        %p468 = pneg %p192
        %p469 = pneg %p189
        %p470 = pneg %p213
        %p471 = pneg %p210
        %p472 = pneg %p234
        %p473 = pneg %p231
        %p474 = pneg %p255
        %p475 = pneg %p252
        %p476 = pneg %p276
        %p477 = pneg %p273
        %p478 = pneg %p302
        %p479 = pneg %p299
        %s480 = sand.u32 %s289, 1
        %s481 = scalar_lea.sflag [#allocation4], %s480
        %s482 = sand.u32 %s289, 1
        %s483 = smul.addr %s482, 32
        %s484 = scalar_lea.vmem [#allocation8], %s483
        %p485 = pneg %p328
        %p486 = pneg %p325
        %s487 = smul.u32 4, %s30
        %p488 = scmp.lt.s32.totalorder %s487, 15
        %s489 = scalar_select %p488, %s487, 15
        %s490 = smul.addr %s489, 8
        %s491 = scalar_lea.vmem %s12, %s490
        %s492 = smul.u32 4, %s30
        %p493 = scmp.lt.s32.totalorder %s492, 15
        %s494 = scalar_select %p493, %s492, 15
        %s495 = smul.addr %s494, 8
        %s496 = scalar_lea.vmem %s2, %s495
        %s497 = smul.u32 4, %s30
        %s498 = smul.u32 4, %s30
        %p499 = scmp.lt.s32.totalorder %s498, 15
        %s500 = scalar_select %p499, %s498, 15
        %s501 = smul.addr %s500, 8
        %s502 = scalar_lea.vmem %s4, %s501
        %s503 = smul.u32 4, %s30
        %s504 = smul.u32 4, %s30
        %p505 = scmp.lt.s32.totalorder %s504, 15
        %s506 = scalar_select %p505, %s504, 15
        %s507 = smul.addr %s506, 4
        %s508 = scalar_lea.vmem %s5, %s507
        %s509 = smul.u32 4, %s30
        %s510 = smul.u32 4, %s30
        %p511 = scmp.lt.s32.totalorder %s510, 15
        %s512 = scalar_select %p511, %s510, 15
        %s513 = smul.addr %s512, 8
        %s514 = scalar_lea.vmem %s6, %s513
        %s515 = smul.u32 4, %s30
        %s516 = smul.u32 4, %s30
        %s517 = smul.u32 4, %s30
        %p518 = scmp.lt.s32.totalorder %s517, 15
        %s519 = scalar_select %p518, %s517, 15
        %s520 = smul.addr %s519, 8
        %s521 = scalar_lea.vmem %s12, %s520
        %s522 = smul.u32 4, %s30
        %v523 = vld [vmem:[%s514] sm:$0xff]
        %v524 = vld [vmem:[%s514 + $0x8] sm:$0xff]
        %v525 = vld [vmem:[%s514 + $0x10] sm:$0xff]
        %v526 = vld [vmem:[%s514 + $0x18] sm:$0xff]
        %v527 = vld [vmem:[%s496] sm:$0xff]
        %v528 = vld [vmem:[%s496 + $0x8] sm:$0xff]
        %v529 = vld [vmem:[%s496 + $0x10] sm:$0xff]
        %v530 = vld [vmem:[%s496 + $0x18] sm:$0xff]
        %v531 = vld [vmem:[%s0] sm:$0xff]
        %v532 = vld [vmem:[%s0 + $0x8] sm:$0xff]
        %v533 = vld [vmem:[%s0 + $0x10] sm:$0xff]
        %v534 = vld [vmem:[%s0 + $0x18] sm:$0xff]
        %s535 = sld [smem:[#allocation6]]
        %s536 = sld [smem:[#allocation3]]
        %v537 = vlaneseq
        %v538 = vshrl.u32 %v537, 7
        %v539 = vsub.s32 0, %v538
        %v540 = vrot.slane %v531, %v539
        %542 = vset.pattern.permute.xlu0 0
        %543 = vperm.xlu0 %542, %v527
        %v544 = vpop.permute.xlu0 %543
        %547 = vset.pattern.permute.xlu0 0
        %548 = vperm.xlu0 %547, %v528
        %v549 = vpop.permute.xlu0 %548
        %552 = vset.pattern.permute.xlu0 0
        %553 = vperm.xlu0 %552, %v529
        %v554 = vpop.permute.xlu0 %553
        %557 = vset.pattern.permute.xlu0 0
        %558 = vperm.xlu0 %557, %v530
        %v559 = vpop.permute.xlu0 %558
        %v561 = vadd.f32 %v540, %v544
        %v562 = vadd.f32 %v540, %v549
        %v563 = vadd.f32 %v540, %v554
        %v564 = vadd.f32 %v540, %v559
        %v565 = vstv %s535
        %v566 = vmul.f32 %v565, %v523
        %v567 = vmul.f32 %v565, %v524
        %v568 = vmul.f32 %v565, %v525
        %v569 = vmul.f32 %v565, %v526
        %v570 = vadd.f32 %v561, %v566
        %v571 = vadd.f32 %v562, %v567
        %v572 = vadd.f32 %v563, %v568
        %v573 = vadd.f32 %v564, %v569
        %v574 = vand.u32 2147483647, %v570
        %v575 = vand.u32 2147483647, %v571
        %v576 = vand.u32 2147483647, %v572
        %v577 = vand.u32 2147483647, %v573
        %v578 = vstv %s536
        %v579 = vmul.f32 %v578, %v574
        %v580 = vmul.f32 %v578, %v575
        %v581 = vmul.f32 %v578, %v576
        %v582 = vmul.f32 %v578, %v577
        %v583 = vadd.f32 %v579, 0.0
        %v584 = vadd.f32 %v580, 0.0
        %v585 = vadd.f32 %v581, 0.0
        %v586 = vadd.f32 %v582, 0.0
        %s587 = sld [smem:[#allocation6 + $0x1]]
        %s588 = sld [smem:[#allocation3 + $0x1]]
        %v589 = vlaneseq
        %v590 = vshrl.u32 %v589, 7
        %v591 = vsub.s32 1, %v590
        %v592 = vrot.slane %v531, %v591
        %593 = vset.pattern.permute.xlu0 1
        %594 = vperm.xlu0 %593, %v527
        %v595 = vpop.permute.xlu0 %594
        %597 = vset.pattern.permute.xlu0 1
        %598 = vperm.xlu0 %597, %v528
        %v599 = vpop.permute.xlu0 %598
        %601 = vset.pattern.permute.xlu0 1
        %602 = vperm.xlu0 %601, %v529
        %v603 = vpop.permute.xlu0 %602
        %605 = vset.pattern.permute.xlu0 1
        %606 = vperm.xlu0 %605, %v530
        %v607 = vpop.permute.xlu0 %606
        %v609 = vadd.f32 %v592, %v595
        %v610 = vadd.f32 %v592, %v599
        %v611 = vadd.f32 %v592, %v603
        %v612 = vadd.f32 %v592, %v607
        %v613 = vstv %s587
        %v614 = vmul.f32 %v613, %v523
        %v615 = vmul.f32 %v613, %v524
        %v616 = vmul.f32 %v613, %v525
        %v617 = vmul.f32 %v613, %v526
        %v618 = vadd.f32 %v609, %v614
        %v619 = vadd.f32 %v610, %v615
        %v620 = vadd.f32 %v611, %v616
        %v621 = vadd.f32 %v612, %v617
        %v622 = vand.u32 2147483647, %v618
        %v623 = vand.u32 2147483647, %v619
        %v624 = vand.u32 2147483647, %v620
        %v625 = vand.u32 2147483647, %v621
        %v626 = vstv %s588
        %v627 = vmul.f32 %v626, %v622
        %v628 = vmul.f32 %v626, %v623
        %v629 = vmul.f32 %v626, %v624
        %v630 = vmul.f32 %v626, %v625
        %v631 = vadd.f32 %v583, %v627
        %v632 = vadd.f32 %v584, %v628
        %v633 = vadd.f32 %v585, %v629
        %v634 = vadd.f32 %v586, %v630
        %s635 = sld [smem:[#allocation6 + $0x2]]
        %s636 = sld [smem:[#allocation3 + $0x2]]
        %v637 = vlaneseq
        %v638 = vshrl.u32 %v637, 7
        %v639 = vsub.s32 2, %v638
        %v640 = vrot.slane %v531, %v639
        %641 = vset.pattern.permute.xlu0 2
        %642 = vperm.xlu0 %641, %v527
        %v643 = vpop.permute.xlu0 %642
        %645 = vset.pattern.permute.xlu0 2
        %646 = vperm.xlu0 %645, %v528
        %v647 = vpop.permute.xlu0 %646
        %649 = vset.pattern.permute.xlu0 2
        %650 = vperm.xlu0 %649, %v529
        %v651 = vpop.permute.xlu0 %650
        %653 = vset.pattern.permute.xlu0 2
        %654 = vperm.xlu0 %653, %v530
        %v655 = vpop.permute.xlu0 %654
        %v657 = vadd.f32 %v640, %v643
        %v658 = vadd.f32 %v640, %v647
        %v659 = vadd.f32 %v640, %v651
        %v660 = vadd.f32 %v640, %v655
        %v661 = vstv %s635
        %v662 = vmul.f32 %v661, %v523
        %v663 = vmul.f32 %v661, %v524
        %v664 = vmul.f32 %v661, %v525
        %v665 = vmul.f32 %v661, %v526
        %v666 = vadd.f32 %v657, %v662
        %v667 = vadd.f32 %v658, %v663
        %v668 = vadd.f32 %v659, %v664
        %v669 = vadd.f32 %v660, %v665
        %v670 = vand.u32 2147483647, %v666
        %v671 = vand.u32 2147483647, %v667
        %v672 = vand.u32 2147483647, %v668
        %v673 = vand.u32 2147483647, %v669
        %v674 = vstv %s636
        %v675 = vmul.f32 %v674, %v670
        %v676 = vmul.f32 %v674, %v671
        %v677 = vmul.f32 %v674, %v672
        %v678 = vmul.f32 %v674, %v673
        %v679 = vadd.f32 %v631, %v675
        %v680 = vadd.f32 %v632, %v676
        %v681 = vadd.f32 %v633, %v677
        %v682 = vadd.f32 %v634, %v678
        %s683 = sld [smem:[#allocation6 + $0x3]]
        %s684 = sld [smem:[#allocation3 + $0x3]]
        %v685 = vlaneseq
        %v686 = vshrl.u32 %v685, 7
        %v687 = vsub.s32 3, %v686
        %v688 = vrot.slane %v531, %v687
        %689 = vset.pattern.permute.xlu0 3
        %690 = vperm.xlu0 %689, %v527
        %v691 = vpop.permute.xlu0 %690
        %693 = vset.pattern.permute.xlu0 3
        %694 = vperm.xlu0 %693, %v528
        %v695 = vpop.permute.xlu0 %694
        %697 = vset.pattern.permute.xlu0 3
        %698 = vperm.xlu0 %697, %v529
        %v699 = vpop.permute.xlu0 %698
        %701 = vset.pattern.permute.xlu0 3
        %702 = vperm.xlu0 %701, %v530
        %v703 = vpop.permute.xlu0 %702
        %v705 = vadd.f32 %v688, %v691
        %v706 = vadd.f32 %v688, %v695
        %v707 = vadd.f32 %v688, %v699
        %v708 = vadd.f32 %v688, %v703
        %v709 = vstv %s683
        %v710 = vmul.f32 %v709, %v523
        %v711 = vmul.f32 %v709, %v524
        %v712 = vmul.f32 %v709, %v525
        %v713 = vmul.f32 %v709, %v526
        %v714 = vadd.f32 %v705, %v710
        %v715 = vadd.f32 %v706, %v711
        %v716 = vadd.f32 %v707, %v712
        %v717 = vadd.f32 %v708, %v713
        %v718 = vand.u32 2147483647, %v714
        %v719 = vand.u32 2147483647, %v715
        %v720 = vand.u32 2147483647, %v716
        %v721 = vand.u32 2147483647, %v717
        %v722 = vstv %s684
        %v723 = vmul.f32 %v722, %v718
        %v724 = vmul.f32 %v722, %v719
        %v725 = vmul.f32 %v722, %v720
        %v726 = vmul.f32 %v722, %v721
        %v727 = vadd.f32 %v679, %v723
        %v728 = vadd.f32 %v680, %v724
        %v729 = vadd.f32 %v681, %v725
        %v730 = vadd.f32 %v682, %v726
        %s731 = sld [smem:[#allocation6 + $0x4]]
        %s732 = sld [smem:[#allocation3 + $0x4]]
        %v733 = vlaneseq
        %v734 = vshrl.u32 %v733, 7
        %v735 = vsub.s32 4, %v734
        %v736 = vrot.slane %v531, %v735
        %737 = vset.pattern.permute.xlu0 4
        %738 = vperm.xlu0 %737, %v527
        %v739 = vpop.permute.xlu0 %738
        %741 = vset.pattern.permute.xlu0 4
        %742 = vperm.xlu0 %741, %v528
        %v743 = vpop.permute.xlu0 %742
        %745 = vset.pattern.permute.xlu0 4
        %746 = vperm.xlu0 %745, %v529
        %v747 = vpop.permute.xlu0 %746
        %749 = vset.pattern.permute.xlu0 4
        %750 = vperm.xlu0 %749, %v530
        %v751 = vpop.permute.xlu0 %750
        %v753 = vadd.f32 %v736, %v739
        %v754 = vadd.f32 %v736, %v743
        %v755 = vadd.f32 %v736, %v747
        %v756 = vadd.f32 %v736, %v751
        %v757 = vstv %s731
        %v758 = vmul.f32 %v757, %v523
        %v759 = vmul.f32 %v757, %v524
        %v760 = vmul.f32 %v757, %v525
        %v761 = vmul.f32 %v757, %v526
        %v762 = vadd.f32 %v753, %v758
        %v763 = vadd.f32 %v754, %v759
        %v764 = vadd.f32 %v755, %v760
        %v765 = vadd.f32 %v756, %v761
        %v766 = vand.u32 2147483647, %v762
        %v767 = vand.u32 2147483647, %v763
        %v768 = vand.u32 2147483647, %v764
        %v769 = vand.u32 2147483647, %v765
        %v770 = vstv %s732
        %v771 = vmul.f32 %v770, %v766
        %v772 = vmul.f32 %v770, %v767
        %v773 = vmul.f32 %v770, %v768
        %v774 = vmul.f32 %v770, %v769
        %v775 = vadd.f32 %v727, %v771
        %v776 = vadd.f32 %v728, %v772
        %v777 = vadd.f32 %v729, %v773
        %v778 = vadd.f32 %v730, %v774
        %s779 = sld [smem:[#allocation6 + $0x5]]
        %s780 = sld [smem:[#allocation3 + $0x5]]
        %v781 = vlaneseq
        %v782 = vshrl.u32 %v781, 7
        %v783 = vsub.s32 5, %v782
        %v784 = vrot.slane %v531, %v783
        %785 = vset.pattern.permute.xlu0 5
        %786 = vperm.xlu0 %785, %v527
        %v787 = vpop.permute.xlu0 %786
        %789 = vset.pattern.permute.xlu0 5
        %790 = vperm.xlu0 %789, %v528
        %v791 = vpop.permute.xlu0 %790
        %793 = vset.pattern.permute.xlu0 5
        %794 = vperm.xlu0 %793, %v529
        %v795 = vpop.permute.xlu0 %794
        %797 = vset.pattern.permute.xlu0 5
        %798 = vperm.xlu0 %797, %v530
        %v799 = vpop.permute.xlu0 %798
        %v801 = vadd.f32 %v784, %v787
        %v802 = vadd.f32 %v784, %v791
        %v803 = vadd.f32 %v784, %v795
        %v804 = vadd.f32 %v784, %v799
        %v805 = vstv %s779
        %v806 = vmul.f32 %v805, %v523
        %v807 = vmul.f32 %v805, %v524
        %v808 = vmul.f32 %v805, %v525
        %v809 = vmul.f32 %v805, %v526
        %v810 = vadd.f32 %v801, %v806
        %v811 = vadd.f32 %v802, %v807
        %v812 = vadd.f32 %v803, %v808
        %v813 = vadd.f32 %v804, %v809
        %v814 = vand.u32 2147483647, %v810
        %v815 = vand.u32 2147483647, %v811
        %v816 = vand.u32 2147483647, %v812
        %v817 = vand.u32 2147483647, %v813
        %v818 = vstv %s780
        %v819 = vmul.f32 %v818, %v814
        %v820 = vmul.f32 %v818, %v815
        %v821 = vmul.f32 %v818, %v816
        %v822 = vmul.f32 %v818, %v817
        %v823 = vadd.f32 %v775, %v819
        %v824 = vadd.f32 %v776, %v820
        %v825 = vadd.f32 %v777, %v821
        %v826 = vadd.f32 %v778, %v822
        %s827 = sld [smem:[#allocation6 + $0x6]]
        %s828 = sld [smem:[#allocation3 + $0x6]]
        %v829 = vlaneseq
        %v830 = vshrl.u32 %v829, 7
        %v831 = vsub.s32 6, %v830
        %v832 = vrot.slane %v531, %v831
        %833 = vset.pattern.permute.xlu0 6
        %834 = vperm.xlu0 %833, %v527
        %v835 = vpop.permute.xlu0 %834
        %837 = vset.pattern.permute.xlu0 6
        %838 = vperm.xlu0 %837, %v528
        %v839 = vpop.permute.xlu0 %838
        %841 = vset.pattern.permute.xlu0 6
        %842 = vperm.xlu0 %841, %v529
        %v843 = vpop.permute.xlu0 %842
        %845 = vset.pattern.permute.xlu0 6
        %846 = vperm.xlu0 %845, %v530
        %v847 = vpop.permute.xlu0 %846
        %v849 = vadd.f32 %v832, %v835
        %v850 = vadd.f32 %v832, %v839
        %v851 = vadd.f32 %v832, %v843
        %v852 = vadd.f32 %v832, %v847
        %v853 = vstv %s827
        %v854 = vmul.f32 %v853, %v523
        %v855 = vmul.f32 %v853, %v524
        %v856 = vmul.f32 %v853, %v525
        %v857 = vmul.f32 %v853, %v526
        %v858 = vadd.f32 %v849, %v854
        %v859 = vadd.f32 %v850, %v855
        %v860 = vadd.f32 %v851, %v856
        %v861 = vadd.f32 %v852, %v857
        %v862 = vand.u32 2147483647, %v858
        %v863 = vand.u32 2147483647, %v859
        %v864 = vand.u32 2147483647, %v860
        %v865 = vand.u32 2147483647, %v861
        %v866 = vstv %s828
        %v867 = vmul.f32 %v866, %v862
        %v868 = vmul.f32 %v866, %v863
        %v869 = vmul.f32 %v866, %v864
        %v870 = vmul.f32 %v866, %v865
        %v871 = vadd.f32 %v823, %v867
        %v872 = vadd.f32 %v824, %v868
        %v873 = vadd.f32 %v825, %v869
        %v874 = vadd.f32 %v826, %v870
        %s875 = sld [smem:[#allocation6 + $0x7]]
        %s876 = sld [smem:[#allocation3 + $0x7]]
        %v877 = vlaneseq
        %v878 = vshrl.u32 %v877, 7
        %v879 = vsub.s32 7, %v878
        %v880 = vrot.slane %v531, %v879
        %881 = vset.pattern.permute.xlu0 7
        %882 = vperm.xlu0 %881, %v527
        %v883 = vpop.permute.xlu0 %882
        %885 = vset.pattern.permute.xlu0 7
        %886 = vperm.xlu0 %885, %v528
        %v887 = vpop.permute.xlu0 %886
        %889 = vset.pattern.permute.xlu0 7
        %890 = vperm.xlu0 %889, %v529
        %v891 = vpop.permute.xlu0 %890
        %893 = vset.pattern.permute.xlu0 7
        %894 = vperm.xlu0 %893, %v530
        %v895 = vpop.permute.xlu0 %894
        %v897 = vadd.f32 %v880, %v883
        %v898 = vadd.f32 %v880, %v887
        %v899 = vadd.f32 %v880, %v891
        %v900 = vadd.f32 %v880, %v895
        %v901 = vstv %s875
        %v902 = vmul.f32 %v901, %v523
        %v903 = vmul.f32 %v901, %v524
        %v904 = vmul.f32 %v901, %v525
        %v905 = vmul.f32 %v901, %v526
        %v906 = vadd.f32 %v897, %v902
        %v907 = vadd.f32 %v898, %v903
        %v908 = vadd.f32 %v899, %v904
        %v909 = vadd.f32 %v900, %v905
        %v910 = vand.u32 2147483647, %v906
        %v911 = vand.u32 2147483647, %v907
        %v912 = vand.u32 2147483647, %v908
        %v913 = vand.u32 2147483647, %v909
        %v914 = vstv %s876
        %v915 = vmul.f32 %v914, %v910
        %v916 = vmul.f32 %v914, %v911
        %v917 = vmul.f32 %v914, %v912
        %v918 = vmul.f32 %v914, %v913
        %v919 = vadd.f32 %v871, %v915
        %v920 = vadd.f32 %v872, %v916
        %v921 = vadd.f32 %v873, %v917
        %v922 = vadd.f32 %v874, %v918
        %s923 = sld [smem:[#allocation6 + $0x8]]
        %s924 = sld [smem:[#allocation3 + $0x8]]
        %v925 = vlaneseq
        %v926 = vshrl.u32 %v925, 7
        %v927 = vsub.s32 0, %v926
        %v928 = vrot.slane %v532, %v927
        %929 = vset.pattern.permute.xlu0 8
        %930 = vperm.xlu0 %929, %v527
        %v931 = vpop.permute.xlu0 %930
        %933 = vset.pattern.permute.xlu0 8
        %934 = vperm.xlu0 %933, %v528
        %v935 = vpop.permute.xlu0 %934
        %937 = vset.pattern.permute.xlu0 8
        %938 = vperm.xlu0 %937, %v529
        %v939 = vpop.permute.xlu0 %938
        %941 = vset.pattern.permute.xlu0 8
        %942 = vperm.xlu0 %941, %v530
        %v943 = vpop.permute.xlu0 %942
        %v945 = vadd.f32 %v928, %v931
        %v946 = vadd.f32 %v928, %v935
        %v947 = vadd.f32 %v928, %v939
        %v948 = vadd.f32 %v928, %v943
        %v949 = vstv %s923
        %v950 = vmul.f32 %v949, %v523
        %v951 = vmul.f32 %v949, %v524
        %v952 = vmul.f32 %v949, %v525
        %v953 = vmul.f32 %v949, %v526
        %v954 = vadd.f32 %v945, %v950
        %v955 = vadd.f32 %v946, %v951
        %v956 = vadd.f32 %v947, %v952
        %v957 = vadd.f32 %v948, %v953
        %v958 = vand.u32 2147483647, %v954
        %v959 = vand.u32 2147483647, %v955
        %v960 = vand.u32 2147483647, %v956
        %v961 = vand.u32 2147483647, %v957
        %v962 = vstv %s924
        %v963 = vmul.f32 %v962, %v958
        %v964 = vmul.f32 %v962, %v959
        %v965 = vmul.f32 %v962, %v960
        %v966 = vmul.f32 %v962, %v961
        %v967 = vadd.f32 %v919, %v963
        %v968 = vadd.f32 %v920, %v964
        %v969 = vadd.f32 %v921, %v965
        %v970 = vadd.f32 %v922, %v966
        %s971 = sld [smem:[#allocation6 + $0x9]]
        %s972 = sld [smem:[#allocation3 + $0x9]]
        %v973 = vlaneseq
        %v974 = vshrl.u32 %v973, 7
        %v975 = vsub.s32 1, %v974
        %v976 = vrot.slane %v532, %v975
        %977 = vset.pattern.permute.xlu0 9
        %978 = vperm.xlu0 %977, %v527
        %v979 = vpop.permute.xlu0 %978
        %981 = vset.pattern.permute.xlu0 9
        %982 = vperm.xlu0 %981, %v528
        %v983 = vpop.permute.xlu0 %982
        %985 = vset.pattern.permute.xlu0 9
        %986 = vperm.xlu0 %985, %v529
        %v987 = vpop.permute.xlu0 %986
        %989 = vset.pattern.permute.xlu0 9
        %990 = vperm.xlu0 %989, %v530
        %v991 = vpop.permute.xlu0 %990
        %v993 = vadd.f32 %v976, %v979
        %v994 = vadd.f32 %v976, %v983
        %v995 = vadd.f32 %v976, %v987
        %v996 = vadd.f32 %v976, %v991
        %v997 = vstv %s971
        %v998 = vmul.f32 %v997, %v523
        %v999 = vmul.f32 %v997, %v524
        %v1000 = vmul.f32 %v997, %v525
        %v1001 = vmul.f32 %v997, %v526
        %v1002 = vadd.f32 %v993, %v998
        %v1003 = vadd.f32 %v994, %v999
        %v1004 = vadd.f32 %v995, %v1000
        %v1005 = vadd.f32 %v996, %v1001
        %v1006 = vand.u32 2147483647, %v1002
        %v1007 = vand.u32 2147483647, %v1003
        %v1008 = vand.u32 2147483647, %v1004
        %v1009 = vand.u32 2147483647, %v1005
        %v1010 = vstv %s972
        %v1011 = vmul.f32 %v1010, %v1006
        %v1012 = vmul.f32 %v1010, %v1007
        %v1013 = vmul.f32 %v1010, %v1008
        %v1014 = vmul.f32 %v1010, %v1009
        %v1015 = vadd.f32 %v967, %v1011
        %v1016 = vadd.f32 %v968, %v1012
        %v1017 = vadd.f32 %v969, %v1013
        %v1018 = vadd.f32 %v970, %v1014
        %s1019 = sld [smem:[#allocation6 + $0xa]]
        %s1020 = sld [smem:[#allocation3 + $0xa]]
        %v1021 = vlaneseq
        %v1022 = vshrl.u32 %v1021, 7
        %v1023 = vsub.s32 2, %v1022
        %v1024 = vrot.slane %v532, %v1023
        %1025 = vset.pattern.permute.xlu0 10
        %1026 = vperm.xlu0 %1025, %v527
        %v1027 = vpop.permute.xlu0 %1026
        %1029 = vset.pattern.permute.xlu0 10
        %1030 = vperm.xlu0 %1029, %v528
        %v1031 = vpop.permute.xlu0 %1030
        %1033 = vset.pattern.permute.xlu0 10
        %1034 = vperm.xlu0 %1033, %v529
        %v1035 = vpop.permute.xlu0 %1034
        %1037 = vset.pattern.permute.xlu0 10
        %1038 = vperm.xlu0 %1037, %v530
        %v1039 = vpop.permute.xlu0 %1038
        %v1041 = vadd.f32 %v1024, %v1027
        %v1042 = vadd.f32 %v1024, %v1031
        %v1043 = vadd.f32 %v1024, %v1035
        %v1044 = vadd.f32 %v1024, %v1039
        %v1045 = vstv %s1019
        %v1046 = vmul.f32 %v1045, %v523
        %v1047 = vmul.f32 %v1045, %v524
        %v1048 = vmul.f32 %v1045, %v525
        %v1049 = vmul.f32 %v1045, %v526
        %v1050 = vadd.f32 %v1041, %v1046
        %v1051 = vadd.f32 %v1042, %v1047
        %v1052 = vadd.f32 %v1043, %v1048
        %v1053 = vadd.f32 %v1044, %v1049
        %v1054 = vand.u32 2147483647, %v1050
        %v1055 = vand.u32 2147483647, %v1051
        %v1056 = vand.u32 2147483647, %v1052
        %v1057 = vand.u32 2147483647, %v1053
        %v1058 = vstv %s1020
        %v1059 = vmul.f32 %v1058, %v1054
        %v1060 = vmul.f32 %v1058, %v1055
        %v1061 = vmul.f32 %v1058, %v1056
        %v1062 = vmul.f32 %v1058, %v1057
        %v1063 = vadd.f32 %v1015, %v1059
        %v1064 = vadd.f32 %v1016, %v1060
        %v1065 = vadd.f32 %v1017, %v1061
        %v1066 = vadd.f32 %v1018, %v1062
        %s1067 = sld [smem:[#allocation6 + $0xb]]
        %s1068 = sld [smem:[#allocation3 + $0xb]]
        %v1069 = vlaneseq
        %v1070 = vshrl.u32 %v1069, 7
        %v1071 = vsub.s32 3, %v1070
        %v1072 = vrot.slane %v532, %v1071
        %1073 = vset.pattern.permute.xlu0 11
        %1074 = vperm.xlu0 %1073, %v527
        %v1075 = vpop.permute.xlu0 %1074
        %1077 = vset.pattern.permute.xlu0 11
        %1078 = vperm.xlu0 %1077, %v528
        %v1079 = vpop.permute.xlu0 %1078
        %1081 = vset.pattern.permute.xlu0 11
        %1082 = vperm.xlu0 %1081, %v529
        %v1083 = vpop.permute.xlu0 %1082
        %1085 = vset.pattern.permute.xlu0 11
        %1086 = vperm.xlu0 %1085, %v530
        %v1087 = vpop.permute.xlu0 %1086
        %v1089 = vadd.f32 %v1072, %v1075
        %v1090 = vadd.f32 %v1072, %v1079
        %v1091 = vadd.f32 %v1072, %v1083
        %v1092 = vadd.f32 %v1072, %v1087
        %v1093 = vstv %s1067
        %v1094 = vmul.f32 %v1093, %v523
        %v1095 = vmul.f32 %v1093, %v524
        %v1096 = vmul.f32 %v1093, %v525
        %v1097 = vmul.f32 %v1093, %v526
        %v1098 = vadd.f32 %v1089, %v1094
        %v1099 = vadd.f32 %v1090, %v1095
        %v1100 = vadd.f32 %v1091, %v1096
        %v1101 = vadd.f32 %v1092, %v1097
        %v1102 = vand.u32 2147483647, %v1098
        %v1103 = vand.u32 2147483647, %v1099
        %v1104 = vand.u32 2147483647, %v1100
        %v1105 = vand.u32 2147483647, %v1101
        %v1106 = vstv %s1068
        %v1107 = vmul.f32 %v1106, %v1102
        %v1108 = vmul.f32 %v1106, %v1103
        %v1109 = vmul.f32 %v1106, %v1104
        %v1110 = vmul.f32 %v1106, %v1105
        %v1111 = vadd.f32 %v1063, %v1107
        %v1112 = vadd.f32 %v1064, %v1108
        %v1113 = vadd.f32 %v1065, %v1109
        %v1114 = vadd.f32 %v1066, %v1110
        %s1115 = sld [smem:[#allocation6 + $0xc]]
        %s1116 = sld [smem:[#allocation3 + $0xc]]
        %v1117 = vlaneseq
        %v1118 = vshrl.u32 %v1117, 7
        %v1119 = vsub.s32 4, %v1118
        %v1120 = vrot.slane %v532, %v1119
        %1121 = vset.pattern.permute.xlu0 12
        %1122 = vperm.xlu0 %1121, %v527
        %v1123 = vpop.permute.xlu0 %1122
        %1125 = vset.pattern.permute.xlu0 12
        %1126 = vperm.xlu0 %1125, %v528
        %v1127 = vpop.permute.xlu0 %1126
        %1129 = vset.pattern.permute.xlu0 12
        %1130 = vperm.xlu0 %1129, %v529
        %v1131 = vpop.permute.xlu0 %1130
        %1133 = vset.pattern.permute.xlu0 12
        %1134 = vperm.xlu0 %1133, %v530
        %v1135 = vpop.permute.xlu0 %1134
        %v1137 = vadd.f32 %v1120, %v1123
        %v1138 = vadd.f32 %v1120, %v1127
        %v1139 = vadd.f32 %v1120, %v1131
        %v1140 = vadd.f32 %v1120, %v1135
        %v1141 = vstv %s1115
        %v1142 = vmul.f32 %v1141, %v523
        %v1143 = vmul.f32 %v1141, %v524
        %v1144 = vmul.f32 %v1141, %v525
        %v1145 = vmul.f32 %v1141, %v526
        %v1146 = vadd.f32 %v1137, %v1142
        %v1147 = vadd.f32 %v1138, %v1143
        %v1148 = vadd.f32 %v1139, %v1144
        %v1149 = vadd.f32 %v1140, %v1145
        %v1150 = vand.u32 2147483647, %v1146
        %v1151 = vand.u32 2147483647, %v1147
        %v1152 = vand.u32 2147483647, %v1148
        %v1153 = vand.u32 2147483647, %v1149
        %v1154 = vstv %s1116
        %v1155 = vmul.f32 %v1154, %v1150
        %v1156 = vmul.f32 %v1154, %v1151
        %v1157 = vmul.f32 %v1154, %v1152
        %v1158 = vmul.f32 %v1154, %v1153
        %v1159 = vadd.f32 %v1111, %v1155
        %v1160 = vadd.f32 %v1112, %v1156
        %v1161 = vadd.f32 %v1113, %v1157
        %v1162 = vadd.f32 %v1114, %v1158
        %s1163 = sld [smem:[#allocation6 + $0xd]]
        %s1164 = sld [smem:[#allocation3 + $0xd]]
        %v1165 = vlaneseq
        %v1166 = vshrl.u32 %v1165, 7
        %v1167 = vsub.s32 5, %v1166
        %v1168 = vrot.slane %v532, %v1167
        %1169 = vset.pattern.permute.xlu0 13
        %1170 = vperm.xlu0 %1169, %v527
        %v1171 = vpop.permute.xlu0 %1170
        %1173 = vset.pattern.permute.xlu0 13
        %1174 = vperm.xlu0 %1173, %v528
        %v1175 = vpop.permute.xlu0 %1174
        %1177 = vset.pattern.permute.xlu0 13
        %1178 = vperm.xlu0 %1177, %v529
        %v1179 = vpop.permute.xlu0 %1178
        %1181 = vset.pattern.permute.xlu0 13
        %1182 = vperm.xlu0 %1181, %v530
        %v1183 = vpop.permute.xlu0 %1182
        %v1185 = vadd.f32 %v1168, %v1171
        %v1186 = vadd.f32 %v1168, %v1175
        %v1187 = vadd.f32 %v1168, %v1179
        %v1188 = vadd.f32 %v1168, %v1183
        %v1189 = vstv %s1163
        %v1190 = vmul.f32 %v1189, %v523
        %v1191 = vmul.f32 %v1189, %v524
        %v1192 = vmul.f32 %v1189, %v525
        %v1193 = vmul.f32 %v1189, %v526
        %v1194 = vadd.f32 %v1185, %v1190
        %v1195 = vadd.f32 %v1186, %v1191
        %v1196 = vadd.f32 %v1187, %v1192
        %v1197 = vadd.f32 %v1188, %v1193
        %v1198 = vand.u32 2147483647, %v1194
        %v1199 = vand.u32 2147483647, %v1195
        %v1200 = vand.u32 2147483647, %v1196
        %v1201 = vand.u32 2147483647, %v1197
        %v1202 = vstv %s1164
        %v1203 = vmul.f32 %v1202, %v1198
        %v1204 = vmul.f32 %v1202, %v1199
        %v1205 = vmul.f32 %v1202, %v1200
        %v1206 = vmul.f32 %v1202, %v1201
        %v1207 = vadd.f32 %v1159, %v1203
        %v1208 = vadd.f32 %v1160, %v1204
        %v1209 = vadd.f32 %v1161, %v1205
        %v1210 = vadd.f32 %v1162, %v1206
        %s1211 = sld [smem:[#allocation6 + $0xe]]
        %s1212 = sld [smem:[#allocation3 + $0xe]]
        %v1213 = vlaneseq
        %v1214 = vshrl.u32 %v1213, 7
        %v1215 = vsub.s32 6, %v1214
        %v1216 = vrot.slane %v532, %v1215
        %1217 = vset.pattern.permute.xlu0 14
        %1218 = vperm.xlu0 %1217, %v527
        %v1219 = vpop.permute.xlu0 %1218
        %1221 = vset.pattern.permute.xlu0 14
        %1222 = vperm.xlu0 %1221, %v528
        %v1223 = vpop.permute.xlu0 %1222
        %1225 = vset.pattern.permute.xlu0 14
        %1226 = vperm.xlu0 %1225, %v529
        %v1227 = vpop.permute.xlu0 %1226
        %1229 = vset.pattern.permute.xlu0 14
        %1230 = vperm.xlu0 %1229, %v530
        %v1231 = vpop.permute.xlu0 %1230
        %v1233 = vadd.f32 %v1216, %v1219
        %v1234 = vadd.f32 %v1216, %v1223
        %v1235 = vadd.f32 %v1216, %v1227
        %v1236 = vadd.f32 %v1216, %v1231
        %v1237 = vstv %s1211
        %v1238 = vmul.f32 %v1237, %v523
        %v1239 = vmul.f32 %v1237, %v524
        %v1240 = vmul.f32 %v1237, %v525
        %v1241 = vmul.f32 %v1237, %v526
        %v1242 = vadd.f32 %v1233, %v1238
        %v1243 = vadd.f32 %v1234, %v1239
        %v1244 = vadd.f32 %v1235, %v1240
        %v1245 = vadd.f32 %v1236, %v1241
        %v1246 = vand.u32 2147483647, %v1242
        %v1247 = vand.u32 2147483647, %v1243
        %v1248 = vand.u32 2147483647, %v1244
        %v1249 = vand.u32 2147483647, %v1245
        %v1250 = vstv %s1212
        %v1251 = vmul.f32 %v1250, %v1246
        %v1252 = vmul.f32 %v1250, %v1247
        %v1253 = vmul.f32 %v1250, %v1248
        %v1254 = vmul.f32 %v1250, %v1249
        %v1255 = vadd.f32 %v1207, %v1251
        %v1256 = vadd.f32 %v1208, %v1252
        %v1257 = vadd.f32 %v1209, %v1253
        %v1258 = vadd.f32 %v1210, %v1254
        %s1259 = sld [smem:[#allocation6 + $0xf]]
        %s1260 = sld [smem:[#allocation3 + $0xf]]
        %v1261 = vlaneseq
        %v1262 = vshrl.u32 %v1261, 7
        %v1263 = vsub.s32 7, %v1262
        %v1264 = vrot.slane %v532, %v1263
        %1265 = vset.pattern.permute.xlu0 15
        %1266 = vperm.xlu0 %1265, %v527
        %v1267 = vpop.permute.xlu0 %1266
        %1269 = vset.pattern.permute.xlu0 15
        %1270 = vperm.xlu0 %1269, %v528
        %v1271 = vpop.permute.xlu0 %1270
        %1273 = vset.pattern.permute.xlu0 15
        %1274 = vperm.xlu0 %1273, %v529
        %v1275 = vpop.permute.xlu0 %1274
        %1277 = vset.pattern.permute.xlu0 15
        %1278 = vperm.xlu0 %1277, %v530
        %v1279 = vpop.permute.xlu0 %1278
        %v1281 = vadd.f32 %v1264, %v1267
        %v1282 = vadd.f32 %v1264, %v1271
        %v1283 = vadd.f32 %v1264, %v1275
        %v1284 = vadd.f32 %v1264, %v1279
        %v1285 = vstv %s1259
        %v1286 = vmul.f32 %v1285, %v523
        %v1287 = vmul.f32 %v1285, %v524
        %v1288 = vmul.f32 %v1285, %v525
        %v1289 = vmul.f32 %v1285, %v526
        %v1290 = vadd.f32 %v1281, %v1286
        %v1291 = vadd.f32 %v1282, %v1287
        %v1292 = vadd.f32 %v1283, %v1288
        %v1293 = vadd.f32 %v1284, %v1289
        %v1294 = vand.u32 2147483647, %v1290
        %v1295 = vand.u32 2147483647, %v1291
        %v1296 = vand.u32 2147483647, %v1292
        %v1297 = vand.u32 2147483647, %v1293
        %v1298 = vstv %s1260
        %v1299 = vmul.f32 %v1298, %v1294
        %v1300 = vmul.f32 %v1298, %v1295
        %v1301 = vmul.f32 %v1298, %v1296
        %v1302 = vmul.f32 %v1298, %v1297
        %v1303 = vadd.f32 %v1255, %v1299
        %v1304 = vadd.f32 %v1256, %v1300
        %v1305 = vadd.f32 %v1257, %v1301
        %v1306 = vadd.f32 %v1258, %v1302
        %s1307 = sld [smem:[#allocation6 + $0x10]]
        %s1308 = sld [smem:[#allocation3 + $0x10]]
        %v1309 = vlaneseq
        %v1310 = vshrl.u32 %v1309, 7
        %v1311 = vsub.s32 0, %v1310
        %v1312 = vrot.slane %v533, %v1311
        %1313 = vset.pattern.permute.xlu0 16
        %1314 = vperm.xlu0 %1313, %v527
        %v1315 = vpop.permute.xlu0 %1314
        %1317 = vset.pattern.permute.xlu0 16
        %1318 = vperm.xlu0 %1317, %v528
        %v1319 = vpop.permute.xlu0 %1318
        %1321 = vset.pattern.permute.xlu0 16
        %1322 = vperm.xlu0 %1321, %v529
        %v1323 = vpop.permute.xlu0 %1322
        %1325 = vset.pattern.permute.xlu0 16
        %1326 = vperm.xlu0 %1325, %v530
        %v1327 = vpop.permute.xlu0 %1326
        %v1329 = vadd.f32 %v1312, %v1315
        %v1330 = vadd.f32 %v1312, %v1319
        %v1331 = vadd.f32 %v1312, %v1323
        %v1332 = vadd.f32 %v1312, %v1327
        %v1333 = vstv %s1307
        %v1334 = vmul.f32 %v1333, %v523
        %v1335 = vmul.f32 %v1333, %v524
        %v1336 = vmul.f32 %v1333, %v525
        %v1337 = vmul.f32 %v1333, %v526
        %v1338 = vadd.f32 %v1329, %v1334
        %v1339 = vadd.f32 %v1330, %v1335
        %v1340 = vadd.f32 %v1331, %v1336
        %v1341 = vadd.f32 %v1332, %v1337
        %v1342 = vand.u32 2147483647, %v1338
        %v1343 = vand.u32 2147483647, %v1339
        %v1344 = vand.u32 2147483647, %v1340
        %v1345 = vand.u32 2147483647, %v1341
        %v1346 = vstv %s1308
        %v1347 = vmul.f32 %v1346, %v1342
        %v1348 = vmul.f32 %v1346, %v1343
        %v1349 = vmul.f32 %v1346, %v1344
        %v1350 = vmul.f32 %v1346, %v1345
        %v1351 = vadd.f32 %v1303, %v1347
        %v1352 = vadd.f32 %v1304, %v1348
        %v1353 = vadd.f32 %v1305, %v1349
        %v1354 = vadd.f32 %v1306, %v1350
        %s1355 = sld [smem:[#allocation6 + $0x11]]
        %s1356 = sld [smem:[#allocation3 + $0x11]]
        %v1357 = vlaneseq
        %v1358 = vshrl.u32 %v1357, 7
        %v1359 = vsub.s32 1, %v1358
        %v1360 = vrot.slane %v533, %v1359
        %1361 = vset.pattern.permute.xlu0 17
        %1362 = vperm.xlu0 %1361, %v527
        %v1363 = vpop.permute.xlu0 %1362
        %1365 = vset.pattern.permute.xlu0 17
        %1366 = vperm.xlu0 %1365, %v528
        %v1367 = vpop.permute.xlu0 %1366
        %1369 = vset.pattern.permute.xlu0 17
        %1370 = vperm.xlu0 %1369, %v529
        %v1371 = vpop.permute.xlu0 %1370
        %1373 = vset.pattern.permute.xlu0 17
        %1374 = vperm.xlu0 %1373, %v530
        %v1375 = vpop.permute.xlu0 %1374
        %v1377 = vadd.f32 %v1360, %v1363
        %v1378 = vadd.f32 %v1360, %v1367
        %v1379 = vadd.f32 %v1360, %v1371
        %v1380 = vadd.f32 %v1360, %v1375
        %v1381 = vstv %s1355
        %v1382 = vmul.f32 %v1381, %v523
        %v1383 = vmul.f32 %v1381, %v524
        %v1384 = vmul.f32 %v1381, %v525
        %v1385 = vmul.f32 %v1381, %v526
        %v1386 = vadd.f32 %v1377, %v1382
        %v1387 = vadd.f32 %v1378, %v1383
        %v1388 = vadd.f32 %v1379, %v1384
        %v1389 = vadd.f32 %v1380, %v1385
        %v1390 = vand.u32 2147483647, %v1386
        %v1391 = vand.u32 2147483647, %v1387
        %v1392 = vand.u32 2147483647, %v1388
        %v1393 = vand.u32 2147483647, %v1389
        %v1394 = vstv %s1356
        %v1395 = vmul.f32 %v1394, %v1390
        %v1396 = vmul.f32 %v1394, %v1391
        %v1397 = vmul.f32 %v1394, %v1392
        %v1398 = vmul.f32 %v1394, %v1393
        %v1399 = vadd.f32 %v1351, %v1395
        %v1400 = vadd.f32 %v1352, %v1396
        %v1401 = vadd.f32 %v1353, %v1397
        %v1402 = vadd.f32 %v1354, %v1398
        %s1403 = sld [smem:[#allocation6 + $0x12]]
        %s1404 = sld [smem:[#allocation3 + $0x12]]
        %v1405 = vlaneseq
        %v1406 = vshrl.u32 %v1405, 7
        %v1407 = vsub.s32 2, %v1406
        %v1408 = vrot.slane %v533, %v1407
        %1409 = vset.pattern.permute.xlu0 18
        %1410 = vperm.xlu0 %1409, %v527
        %v1411 = vpop.permute.xlu0 %1410
        %1413 = vset.pattern.permute.xlu0 18
        %1414 = vperm.xlu0 %1413, %v528
        %v1415 = vpop.permute.xlu0 %1414
        %1417 = vset.pattern.permute.xlu0 18
        %1418 = vperm.xlu0 %1417, %v529
        %v1419 = vpop.permute.xlu0 %1418
        %1421 = vset.pattern.permute.xlu0 18
        %1422 = vperm.xlu0 %1421, %v530
        %v1423 = vpop.permute.xlu0 %1422
        %v1425 = vadd.f32 %v1408, %v1411
        %v1426 = vadd.f32 %v1408, %v1415
        %v1427 = vadd.f32 %v1408, %v1419
        %v1428 = vadd.f32 %v1408, %v1423
        %v1429 = vstv %s1403
        %v1430 = vmul.f32 %v1429, %v523
        %v1431 = vmul.f32 %v1429, %v524
        %v1432 = vmul.f32 %v1429, %v525
        %v1433 = vmul.f32 %v1429, %v526
        %v1434 = vadd.f32 %v1425, %v1430
        %v1435 = vadd.f32 %v1426, %v1431
        %v1436 = vadd.f32 %v1427, %v1432
        %v1437 = vadd.f32 %v1428, %v1433
        %v1438 = vand.u32 2147483647, %v1434
        %v1439 = vand.u32 2147483647, %v1435
        %v1440 = vand.u32 2147483647, %v1436
        %v1441 = vand.u32 2147483647, %v1437
        %v1442 = vstv %s1404
        %v1443 = vmul.f32 %v1442, %v1438
        %v1444 = vmul.f32 %v1442, %v1439
        %v1445 = vmul.f32 %v1442, %v1440
        %v1446 = vmul.f32 %v1442, %v1441
        %v1447 = vadd.f32 %v1399, %v1443
        %v1448 = vadd.f32 %v1400, %v1444
        %v1449 = vadd.f32 %v1401, %v1445
        %v1450 = vadd.f32 %v1402, %v1446
        %s1451 = sld [smem:[#allocation6 + $0x13]]
        %s1452 = sld [smem:[#allocation3 + $0x13]]
        %v1453 = vlaneseq
        %v1454 = vshrl.u32 %v1453, 7
        %v1455 = vsub.s32 3, %v1454
        %v1456 = vrot.slane %v533, %v1455
        %1457 = vset.pattern.permute.xlu0 19
        %1458 = vperm.xlu0 %1457, %v527
        %v1459 = vpop.permute.xlu0 %1458
        %1461 = vset.pattern.permute.xlu0 19
        %1462 = vperm.xlu0 %1461, %v528
        %v1463 = vpop.permute.xlu0 %1462
        %1465 = vset.pattern.permute.xlu0 19
        %1466 = vperm.xlu0 %1465, %v529
        %v1467 = vpop.permute.xlu0 %1466
        %1469 = vset.pattern.permute.xlu0 19
        %1470 = vperm.xlu0 %1469, %v530
        %v1471 = vpop.permute.xlu0 %1470
        %v1473 = vadd.f32 %v1456, %v1459
        %v1474 = vadd.f32 %v1456, %v1463
        %v1475 = vadd.f32 %v1456, %v1467
        %v1476 = vadd.f32 %v1456, %v1471
        %v1477 = vstv %s1451
        %v1478 = vmul.f32 %v1477, %v523
        %v1479 = vmul.f32 %v1477, %v524
        %v1480 = vmul.f32 %v1477, %v525
        %v1481 = vmul.f32 %v1477, %v526
        %v1482 = vadd.f32 %v1473, %v1478
        %v1483 = vadd.f32 %v1474, %v1479
        %v1484 = vadd.f32 %v1475, %v1480
        %v1485 = vadd.f32 %v1476, %v1481
        %v1486 = vand.u32 2147483647, %v1482
        %v1487 = vand.u32 2147483647, %v1483
        %v1488 = vand.u32 2147483647, %v1484
        %v1489 = vand.u32 2147483647, %v1485
        %v1490 = vstv %s1452
        %v1491 = vmul.f32 %v1490, %v1486
        %v1492 = vmul.f32 %v1490, %v1487
        %v1493 = vmul.f32 %v1490, %v1488
        %v1494 = vmul.f32 %v1490, %v1489
        %v1495 = vadd.f32 %v1447, %v1491
        %v1496 = vadd.f32 %v1448, %v1492
        %v1497 = vadd.f32 %v1449, %v1493
        %v1498 = vadd.f32 %v1450, %v1494
        %s1499 = sld [smem:[#allocation6 + $0x14]]
        %s1500 = sld [smem:[#allocation3 + $0x14]]
        %v1501 = vlaneseq
        %v1502 = vshrl.u32 %v1501, 7
        %v1503 = vsub.s32 4, %v1502
        %v1504 = vrot.slane %v533, %v1503
        %1505 = vset.pattern.permute.xlu0 20
        %1506 = vperm.xlu0 %1505, %v527
        %v1507 = vpop.permute.xlu0 %1506
        %1509 = vset.pattern.permute.xlu0 20
        %1510 = vperm.xlu0 %1509, %v528
        %v1511 = vpop.permute.xlu0 %1510
        %1513 = vset.pattern.permute.xlu0 20
        %1514 = vperm.xlu0 %1513, %v529
        %v1515 = vpop.permute.xlu0 %1514
        %1517 = vset.pattern.permute.xlu0 20
        %1518 = vperm.xlu0 %1517, %v530
        %v1519 = vpop.permute.xlu0 %1518
        %v1521 = vadd.f32 %v1504, %v1507
        %v1522 = vadd.f32 %v1504, %v1511
        %v1523 = vadd.f32 %v1504, %v1515
        %v1524 = vadd.f32 %v1504, %v1519
        %v1525 = vstv %s1499
        %v1526 = vmul.f32 %v1525, %v523
        %v1527 = vmul.f32 %v1525, %v524
        %v1528 = vmul.f32 %v1525, %v525
        %v1529 = vmul.f32 %v1525, %v526
        %v1530 = vadd.f32 %v1521, %v1526
        %v1531 = vadd.f32 %v1522, %v1527
        %v1532 = vadd.f32 %v1523, %v1528
        %v1533 = vadd.f32 %v1524, %v1529
        %v1534 = vand.u32 2147483647, %v1530
        %v1535 = vand.u32 2147483647, %v1531
        %v1536 = vand.u32 2147483647, %v1532
        %v1537 = vand.u32 2147483647, %v1533
        %v1538 = vstv %s1500
        %v1539 = vmul.f32 %v1538, %v1534
        %v1540 = vmul.f32 %v1538, %v1535
        %v1541 = vmul.f32 %v1538, %v1536
        %v1542 = vmul.f32 %v1538, %v1537
        %v1543 = vadd.f32 %v1495, %v1539
        %v1544 = vadd.f32 %v1496, %v1540
        %v1545 = vadd.f32 %v1497, %v1541
        %v1546 = vadd.f32 %v1498, %v1542
        %s1547 = sld [smem:[#allocation6 + $0x15]]
        %s1548 = sld [smem:[#allocation3 + $0x15]]
        %v1549 = vlaneseq
        %v1550 = vshrl.u32 %v1549, 7
        %v1551 = vsub.s32 5, %v1550
        %v1552 = vrot.slane %v533, %v1551
        %1553 = vset.pattern.permute.xlu0 21
        %1554 = vperm.xlu0 %1553, %v527
        %v1555 = vpop.permute.xlu0 %1554
        %1557 = vset.pattern.permute.xlu0 21
        %1558 = vperm.xlu0 %1557, %v528
        %v1559 = vpop.permute.xlu0 %1558
        %1561 = vset.pattern.permute.xlu0 21
        %1562 = vperm.xlu0 %1561, %v529
        %v1563 = vpop.permute.xlu0 %1562
        %1565 = vset.pattern.permute.xlu0 21
        %1566 = vperm.xlu0 %1565, %v530
        %v1567 = vpop.permute.xlu0 %1566
        %v1569 = vadd.f32 %v1552, %v1555
        %v1570 = vadd.f32 %v1552, %v1559
        %v1571 = vadd.f32 %v1552, %v1563
        %v1572 = vadd.f32 %v1552, %v1567
        %v1573 = vstv %s1547
        %v1574 = vmul.f32 %v1573, %v523
        %v1575 = vmul.f32 %v1573, %v524
        %v1576 = vmul.f32 %v1573, %v525
        %v1577 = vmul.f32 %v1573, %v526
        %v1578 = vadd.f32 %v1569, %v1574
        %v1579 = vadd.f32 %v1570, %v1575
        %v1580 = vadd.f32 %v1571, %v1576
        %v1581 = vadd.f32 %v1572, %v1577
        %v1582 = vand.u32 2147483647, %v1578
        %v1583 = vand.u32 2147483647, %v1579
        %v1584 = vand.u32 2147483647, %v1580
        %v1585 = vand.u32 2147483647, %v1581
        %v1586 = vstv %s1548
        %v1587 = vmul.f32 %v1586, %v1582
        %v1588 = vmul.f32 %v1586, %v1583
        %v1589 = vmul.f32 %v1586, %v1584
        %v1590 = vmul.f32 %v1586, %v1585
        %v1591 = vadd.f32 %v1543, %v1587
        %v1592 = vadd.f32 %v1544, %v1588
        %v1593 = vadd.f32 %v1545, %v1589
        %v1594 = vadd.f32 %v1546, %v1590
        %s1595 = sld [smem:[#allocation6 + $0x16]]
        %s1596 = sld [smem:[#allocation3 + $0x16]]
        %v1597 = vlaneseq
        %v1598 = vshrl.u32 %v1597, 7
        %v1599 = vsub.s32 6, %v1598
        %v1600 = vrot.slane %v533, %v1599
        %1601 = vset.pattern.permute.xlu0 22
        %1602 = vperm.xlu0 %1601, %v527
        %v1603 = vpop.permute.xlu0 %1602
        %1605 = vset.pattern.permute.xlu0 22
        %1606 = vperm.xlu0 %1605, %v528
        %v1607 = vpop.permute.xlu0 %1606
        %1609 = vset.pattern.permute.xlu0 22
        %1610 = vperm.xlu0 %1609, %v529
        %v1611 = vpop.permute.xlu0 %1610
        %1613 = vset.pattern.permute.xlu0 22
        %1614 = vperm.xlu0 %1613, %v530
        %v1615 = vpop.permute.xlu0 %1614
        %v1617 = vadd.f32 %v1600, %v1603
        %v1618 = vadd.f32 %v1600, %v1607
        %v1619 = vadd.f32 %v1600, %v1611
        %v1620 = vadd.f32 %v1600, %v1615
        %v1621 = vstv %s1595
        %v1622 = vmul.f32 %v1621, %v523
        %v1623 = vmul.f32 %v1621, %v524
        %v1624 = vmul.f32 %v1621, %v525
        %v1625 = vmul.f32 %v1621, %v526
        %v1626 = vadd.f32 %v1617, %v1622
        %v1627 = vadd.f32 %v1618, %v1623
        %v1628 = vadd.f32 %v1619, %v1624
        %v1629 = vadd.f32 %v1620, %v1625
        %v1630 = vand.u32 2147483647, %v1626
        %v1631 = vand.u32 2147483647, %v1627
        %v1632 = vand.u32 2147483647, %v1628
        %v1633 = vand.u32 2147483647, %v1629
        %v1634 = vstv %s1596
        %v1635 = vmul.f32 %v1634, %v1630
        %v1636 = vmul.f32 %v1634, %v1631
        %v1637 = vmul.f32 %v1634, %v1632
        %v1638 = vmul.f32 %v1634, %v1633
        %v1639 = vadd.f32 %v1591, %v1635
        %v1640 = vadd.f32 %v1592, %v1636
        %v1641 = vadd.f32 %v1593, %v1637
        %v1642 = vadd.f32 %v1594, %v1638
        %s1643 = sld [smem:[#allocation6 + $0x17]]
        %s1644 = sld [smem:[#allocation3 + $0x17]]
        %v1645 = vlaneseq
        %v1646 = vshrl.u32 %v1645, 7
        %v1647 = vsub.s32 7, %v1646
        %v1648 = vrot.slane %v533, %v1647
        %1649 = vset.pattern.permute.xlu0 23
        %1650 = vperm.xlu0 %1649, %v527
        %v1651 = vpop.permute.xlu0 %1650
        %1653 = vset.pattern.permute.xlu0 23
        %1654 = vperm.xlu0 %1653, %v528
        %v1655 = vpop.permute.xlu0 %1654
        %1657 = vset.pattern.permute.xlu0 23
        %1658 = vperm.xlu0 %1657, %v529
        %v1659 = vpop.permute.xlu0 %1658
        %1661 = vset.pattern.permute.xlu0 23
        %1662 = vperm.xlu0 %1661, %v530
        %v1663 = vpop.permute.xlu0 %1662
        %v1665 = vadd.f32 %v1648, %v1651
        %v1666 = vadd.f32 %v1648, %v1655
        %v1667 = vadd.f32 %v1648, %v1659
        %v1668 = vadd.f32 %v1648, %v1663
        %v1669 = vstv %s1643
        %v1670 = vmul.f32 %v1669, %v523
        %v1671 = vmul.f32 %v1669, %v524
        %v1672 = vmul.f32 %v1669, %v525
        %v1673 = vmul.f32 %v1669, %v526
        %v1674 = vadd.f32 %v1665, %v1670
        %v1675 = vadd.f32 %v1666, %v1671
        %v1676 = vadd.f32 %v1667, %v1672
        %v1677 = vadd.f32 %v1668, %v1673
        %v1678 = vand.u32 2147483647, %v1674
        %v1679 = vand.u32 2147483647, %v1675
        %v1680 = vand.u32 2147483647, %v1676
        %v1681 = vand.u32 2147483647, %v1677
        %v1682 = vstv %s1644
        %v1683 = vmul.f32 %v1682, %v1678
        %v1684 = vmul.f32 %v1682, %v1679
        %v1685 = vmul.f32 %v1682, %v1680
        %v1686 = vmul.f32 %v1682, %v1681
        %v1687 = vadd.f32 %v1639, %v1683
        %v1688 = vadd.f32 %v1640, %v1684
        %v1689 = vadd.f32 %v1641, %v1685
        %v1690 = vadd.f32 %v1642, %v1686
        %s1691 = sld [smem:[#allocation6 + $0x18]]
        %s1692 = sld [smem:[#allocation3 + $0x18]]
        %v1693 = vlaneseq
        %v1694 = vshrl.u32 %v1693, 7
        %v1695 = vsub.s32 0, %v1694
        %v1696 = vrot.slane %v534, %v1695
        %1697 = vset.pattern.permute.xlu0 24
        %1698 = vperm.xlu0 %1697, %v527
        %v1699 = vpop.permute.xlu0 %1698
        %1701 = vset.pattern.permute.xlu0 24
        %1702 = vperm.xlu0 %1701, %v528
        %v1703 = vpop.permute.xlu0 %1702
        %1705 = vset.pattern.permute.xlu0 24
        %1706 = vperm.xlu0 %1705, %v529
        %v1707 = vpop.permute.xlu0 %1706
        %1709 = vset.pattern.permute.xlu0 24
        %1710 = vperm.xlu0 %1709, %v530
        %v1711 = vpop.permute.xlu0 %1710
        %v1713 = vadd.f32 %v1696, %v1699
        %v1714 = vadd.f32 %v1696, %v1703
        %v1715 = vadd.f32 %v1696, %v1707
        %v1716 = vadd.f32 %v1696, %v1711
        %v1717 = vstv %s1691
        %v1718 = vmul.f32 %v1717, %v523
        %v1719 = vmul.f32 %v1717, %v524
        %v1720 = vmul.f32 %v1717, %v525
        %v1721 = vmul.f32 %v1717, %v526
        %v1722 = vadd.f32 %v1713, %v1718
        %v1723 = vadd.f32 %v1714, %v1719
        %v1724 = vadd.f32 %v1715, %v1720
        %v1725 = vadd.f32 %v1716, %v1721
        %v1726 = vand.u32 2147483647, %v1722
        %v1727 = vand.u32 2147483647, %v1723
        %v1728 = vand.u32 2147483647, %v1724
        %v1729 = vand.u32 2147483647, %v1725
        %v1730 = vstv %s1692
        %v1731 = vmul.f32 %v1730, %v1726
        %v1732 = vmul.f32 %v1730, %v1727
        %v1733 = vmul.f32 %v1730, %v1728
        %v1734 = vmul.f32 %v1730, %v1729
        %v1735 = vadd.f32 %v1687, %v1731
        %v1736 = vadd.f32 %v1688, %v1732
        %v1737 = vadd.f32 %v1689, %v1733
        %v1738 = vadd.f32 %v1690, %v1734
        %s1739 = sld [smem:[#allocation6 + $0x19]]
        %s1740 = sld [smem:[#allocation3 + $0x19]]
        %v1741 = vlaneseq
        %v1742 = vshrl.u32 %v1741, 7
        %v1743 = vsub.s32 1, %v1742
        %v1744 = vrot.slane %v534, %v1743
        %1745 = vset.pattern.permute.xlu0 25
        %1746 = vperm.xlu0 %1745, %v527
        %v1747 = vpop.permute.xlu0 %1746
        %1749 = vset.pattern.permute.xlu0 25
        %1750 = vperm.xlu0 %1749, %v528
        %v1751 = vpop.permute.xlu0 %1750
        %1753 = vset.pattern.permute.xlu0 25
        %1754 = vperm.xlu0 %1753, %v529
        %v1755 = vpop.permute.xlu0 %1754
        %1757 = vset.pattern.permute.xlu0 25
        %1758 = vperm.xlu0 %1757, %v530
        %v1759 = vpop.permute.xlu0 %1758
        %v1761 = vadd.f32 %v1744, %v1747
        %v1762 = vadd.f32 %v1744, %v1751
        %v1763 = vadd.f32 %v1744, %v1755
        %v1764 = vadd.f32 %v1744, %v1759
        %v1765 = vstv %s1739
        %v1766 = vmul.f32 %v1765, %v523
        %v1767 = vmul.f32 %v1765, %v524
        %v1768 = vmul.f32 %v1765, %v525
        %v1769 = vmul.f32 %v1765, %v526
        %v1770 = vadd.f32 %v1761, %v1766
        %v1771 = vadd.f32 %v1762, %v1767
        %v1772 = vadd.f32 %v1763, %v1768
        %v1773 = vadd.f32 %v1764, %v1769
        %v1774 = vand.u32 2147483647, %v1770
        %v1775 = vand.u32 2147483647, %v1771
        %v1776 = vand.u32 2147483647, %v1772
        %v1777 = vand.u32 2147483647, %v1773
        %v1778 = vstv %s1740
        %v1779 = vmul.f32 %v1778, %v1774
        %v1780 = vmul.f32 %v1778, %v1775
        %v1781 = vmul.f32 %v1778, %v1776
        %v1782 = vmul.f32 %v1778, %v1777
        %v1783 = vadd.f32 %v1735, %v1779
        %v1784 = vadd.f32 %v1736, %v1780
        %v1785 = vadd.f32 %v1737, %v1781
        %v1786 = vadd.f32 %v1738, %v1782
        %s1787 = sld [smem:[#allocation6 + $0x1a]]
        %s1788 = sld [smem:[#allocation3 + $0x1a]]
        %v1789 = vlaneseq
        %v1790 = vshrl.u32 %v1789, 7
        %v1791 = vsub.s32 2, %v1790
        %v1792 = vrot.slane %v534, %v1791
        %1793 = vset.pattern.permute.xlu0 26
        %1794 = vperm.xlu0 %1793, %v527
        %v1795 = vpop.permute.xlu0 %1794
        %1797 = vset.pattern.permute.xlu0 26
        %1798 = vperm.xlu0 %1797, %v528
        %v1799 = vpop.permute.xlu0 %1798
        %1801 = vset.pattern.permute.xlu0 26
        %1802 = vperm.xlu0 %1801, %v529
        %v1803 = vpop.permute.xlu0 %1802
        %1805 = vset.pattern.permute.xlu0 26
        %1806 = vperm.xlu0 %1805, %v530
        %v1807 = vpop.permute.xlu0 %1806
        %v1809 = vadd.f32 %v1792, %v1795
        %v1810 = vadd.f32 %v1792, %v1799
        %v1811 = vadd.f32 %v1792, %v1803
        %v1812 = vadd.f32 %v1792, %v1807
        %v1813 = vstv %s1787
        %v1814 = vmul.f32 %v1813, %v523
        %v1815 = vmul.f32 %v1813, %v524
        %v1816 = vmul.f32 %v1813, %v525
        %v1817 = vmul.f32 %v1813, %v526
        %v1818 = vadd.f32 %v1809, %v1814
        %v1819 = vadd.f32 %v1810, %v1815
        %v1820 = vadd.f32 %v1811, %v1816
        %v1821 = vadd.f32 %v1812, %v1817
        %v1822 = vand.u32 2147483647, %v1818
        %v1823 = vand.u32 2147483647, %v1819
        %v1824 = vand.u32 2147483647, %v1820
        %v1825 = vand.u32 2147483647, %v1821
        %v1826 = vstv %s1788
        %v1827 = vmul.f32 %v1826, %v1822
        %v1828 = vmul.f32 %v1826, %v1823
        %v1829 = vmul.f32 %v1826, %v1824
        %v1830 = vmul.f32 %v1826, %v1825
        %v1831 = vadd.f32 %v1783, %v1827
        %v1832 = vadd.f32 %v1784, %v1828
        %v1833 = vadd.f32 %v1785, %v1829
        %v1834 = vadd.f32 %v1786, %v1830
        %s1835 = sld [smem:[#allocation6 + $0x1b]]
        %s1836 = sld [smem:[#allocation3 + $0x1b]]
        %v1837 = vlaneseq
        %v1838 = vshrl.u32 %v1837, 7
        %v1839 = vsub.s32 3, %v1838
        %v1840 = vrot.slane %v534, %v1839
        %1841 = vset.pattern.permute.xlu0 27
        %1842 = vperm.xlu0 %1841, %v527
        %v1843 = vpop.permute.xlu0 %1842
        %1845 = vset.pattern.permute.xlu0 27
        %1846 = vperm.xlu0 %1845, %v528
        %v1847 = vpop.permute.xlu0 %1846
        %1849 = vset.pattern.permute.xlu0 27
        %1850 = vperm.xlu0 %1849, %v529
        %v1851 = vpop.permute.xlu0 %1850
        %1853 = vset.pattern.permute.xlu0 27
        %1854 = vperm.xlu0 %1853, %v530
        %v1855 = vpop.permute.xlu0 %1854
        %v1857 = vadd.f32 %v1840, %v1843
        %v1858 = vadd.f32 %v1840, %v1847
        %v1859 = vadd.f32 %v1840, %v1851
        %v1860 = vadd.f32 %v1840, %v1855
        %v1861 = vstv %s1835
        %v1862 = vmul.f32 %v1861, %v523
        %v1863 = vmul.f32 %v1861, %v524
        %v1864 = vmul.f32 %v1861, %v525
        %v1865 = vmul.f32 %v1861, %v526
        %v1866 = vadd.f32 %v1857, %v1862
        %v1867 = vadd.f32 %v1858, %v1863
        %v1868 = vadd.f32 %v1859, %v1864
        %v1869 = vadd.f32 %v1860, %v1865
        %v1870 = vand.u32 2147483647, %v1866
        %v1871 = vand.u32 2147483647, %v1867
        %v1872 = vand.u32 2147483647, %v1868
        %v1873 = vand.u32 2147483647, %v1869
        %v1874 = vstv %s1836
        %v1875 = vmul.f32 %v1874, %v1870
        %v1876 = vmul.f32 %v1874, %v1871
        %v1877 = vmul.f32 %v1874, %v1872
        %v1878 = vmul.f32 %v1874, %v1873
        %v1879 = vadd.f32 %v1831, %v1875
        %v1880 = vadd.f32 %v1832, %v1876
        %v1881 = vadd.f32 %v1833, %v1877
        %v1882 = vadd.f32 %v1834, %v1878
        %s1883 = sld [smem:[#allocation6 + $0x1c]]
        %s1884 = sld [smem:[#allocation3 + $0x1c]]
        %v1885 = vlaneseq
        %v1886 = vshrl.u32 %v1885, 7
        %v1887 = vsub.s32 4, %v1886
        %v1888 = vrot.slane %v534, %v1887
        %1889 = vset.pattern.permute.xlu0 28
        %1890 = vperm.xlu0 %1889, %v527
        %v1891 = vpop.permute.xlu0 %1890
        %1893 = vset.pattern.permute.xlu0 28
        %1894 = vperm.xlu0 %1893, %v528
        %v1895 = vpop.permute.xlu0 %1894
        %1897 = vset.pattern.permute.xlu0 28
        %1898 = vperm.xlu0 %1897, %v529
        %v1899 = vpop.permute.xlu0 %1898
        %1901 = vset.pattern.permute.xlu0 28
        %1902 = vperm.xlu0 %1901, %v530
        %v1903 = vpop.permute.xlu0 %1902
        %v1905 = vadd.f32 %v1888, %v1891
        %v1906 = vadd.f32 %v1888, %v1895
        %v1907 = vadd.f32 %v1888, %v1899
        %v1908 = vadd.f32 %v1888, %v1903
        %v1909 = vstv %s1883
        %v1910 = vmul.f32 %v1909, %v523
        %v1911 = vmul.f32 %v1909, %v524
        %v1912 = vmul.f32 %v1909, %v525
        %v1913 = vmul.f32 %v1909, %v526
        %v1914 = vadd.f32 %v1905, %v1910
        %v1915 = vadd.f32 %v1906, %v1911
        %v1916 = vadd.f32 %v1907, %v1912
        %v1917 = vadd.f32 %v1908, %v1913
        %v1918 = vand.u32 2147483647, %v1914
        %v1919 = vand.u32 2147483647, %v1915
        %v1920 = vand.u32 2147483647, %v1916
        %v1921 = vand.u32 2147483647, %v1917
        %v1922 = vstv %s1884
        %v1923 = vmul.f32 %v1922, %v1918
        %v1924 = vmul.f32 %v1922, %v1919
        %v1925 = vmul.f32 %v1922, %v1920
        %v1926 = vmul.f32 %v1922, %v1921
        %v1927 = vadd.f32 %v1879, %v1923
        %v1928 = vadd.f32 %v1880, %v1924
        %v1929 = vadd.f32 %v1881, %v1925
        %v1930 = vadd.f32 %v1882, %v1926
        %s1931 = sld [smem:[#allocation6 + $0x1d]]
        %s1932 = sld [smem:[#allocation3 + $0x1d]]
        %v1933 = vlaneseq
        %v1934 = vshrl.u32 %v1933, 7
        %v1935 = vsub.s32 5, %v1934
        %v1936 = vrot.slane %v534, %v1935
        %1937 = vset.pattern.permute.xlu0 29
        %1938 = vperm.xlu0 %1937, %v527
        %v1939 = vpop.permute.xlu0 %1938
        %1941 = vset.pattern.permute.xlu0 29
        %1942 = vperm.xlu0 %1941, %v528
        %v1943 = vpop.permute.xlu0 %1942
        %1945 = vset.pattern.permute.xlu0 29
        %1946 = vperm.xlu0 %1945, %v529
        %v1947 = vpop.permute.xlu0 %1946
        %1949 = vset.pattern.permute.xlu0 29
        %1950 = vperm.xlu0 %1949, %v530
        %v1951 = vpop.permute.xlu0 %1950
        %v1953 = vadd.f32 %v1936, %v1939
        %v1954 = vadd.f32 %v1936, %v1943
        %v1955 = vadd.f32 %v1936, %v1947
        %v1956 = vadd.f32 %v1936, %v1951
        %v1957 = vstv %s1931
        %v1958 = vmul.f32 %v1957, %v523
        %v1959 = vmul.f32 %v1957, %v524
        %v1960 = vmul.f32 %v1957, %v525
        %v1961 = vmul.f32 %v1957, %v526
        %v1962 = vadd.f32 %v1953, %v1958
        %v1963 = vadd.f32 %v1954, %v1959
        %v1964 = vadd.f32 %v1955, %v1960
        %v1965 = vadd.f32 %v1956, %v1961
        %v1966 = vand.u32 2147483647, %v1962
        %v1967 = vand.u32 2147483647, %v1963
        %v1968 = vand.u32 2147483647, %v1964
        %v1969 = vand.u32 2147483647, %v1965
        %v1970 = vstv %s1932
        %v1971 = vmul.f32 %v1970, %v1966
        %v1972 = vmul.f32 %v1970, %v1967
        %v1973 = vmul.f32 %v1970, %v1968
        %v1974 = vmul.f32 %v1970, %v1969
        %v1975 = vadd.f32 %v1927, %v1971
        %v1976 = vadd.f32 %v1928, %v1972
        %v1977 = vadd.f32 %v1929, %v1973
        %v1978 = vadd.f32 %v1930, %v1974
        %s1979 = sld [smem:[#allocation6 + $0x1e]]
        %s1980 = sld [smem:[#allocation3 + $0x1e]]
        %v1981 = vlaneseq
        %v1982 = vshrl.u32 %v1981, 7
        %v1983 = vsub.s32 6, %v1982
        %v1984 = vrot.slane %v534, %v1983
        %1985 = vset.pattern.permute.xlu0 30
        %1986 = vperm.xlu0 %1985, %v527
        %v1987 = vpop.permute.xlu0 %1986
        %1989 = vset.pattern.permute.xlu0 30
        %1990 = vperm.xlu0 %1989, %v528
        %v1991 = vpop.permute.xlu0 %1990
        %1993 = vset.pattern.permute.xlu0 30
        %1994 = vperm.xlu0 %1993, %v529
        %v1995 = vpop.permute.xlu0 %1994
        %1997 = vset.pattern.permute.xlu0 30
        %1998 = vperm.xlu0 %1997, %v530
        %v1999 = vpop.permute.xlu0 %1998
        %v2001 = vadd.f32 %v1984, %v1987
        %v2002 = vadd.f32 %v1984, %v1991
        %v2003 = vadd.f32 %v1984, %v1995
        %v2004 = vadd.f32 %v1984, %v1999
        %v2005 = vstv %s1979
        %v2006 = vmul.f32 %v2005, %v523
        %v2007 = vmul.f32 %v2005, %v524
        %v2008 = vmul.f32 %v2005, %v525
        %v2009 = vmul.f32 %v2005, %v526
        %v2010 = vadd.f32 %v2001, %v2006
        %v2011 = vadd.f32 %v2002, %v2007
        %v2012 = vadd.f32 %v2003, %v2008
        %v2013 = vadd.f32 %v2004, %v2009
        %v2014 = vand.u32 2147483647, %v2010
        %v2015 = vand.u32 2147483647, %v2011
        %v2016 = vand.u32 2147483647, %v2012
        %v2017 = vand.u32 2147483647, %v2013
        %v2018 = vstv %s1980
        %v2019 = vmul.f32 %v2018, %v2014
        %v2020 = vmul.f32 %v2018, %v2015
        %v2021 = vmul.f32 %v2018, %v2016
        %v2022 = vmul.f32 %v2018, %v2017
        %v2023 = vadd.f32 %v1975, %v2019
        %v2024 = vadd.f32 %v1976, %v2020
        %v2025 = vadd.f32 %v1977, %v2021
        %v2026 = vadd.f32 %v1978, %v2022
        %s2027 = sld [smem:[#allocation6 + $0x1f]]
        %s2028 = sld [smem:[#allocation3 + $0x1f]]
        %v2029 = vlaneseq
        %v2030 = vshrl.u32 %v2029, 7
        %v2031 = vsub.s32 7, %v2030
        %v2032 = vrot.slane %v534, %v2031
        %2033 = vset.pattern.permute.xlu0 31
        %2034 = vperm.xlu0 %2033, %v527
        %v2035 = vpop.permute.xlu0 %2034
        %2037 = vset.pattern.permute.xlu0 31
        %2038 = vperm.xlu0 %2037, %v528
        %v2039 = vpop.permute.xlu0 %2038
        %2041 = vset.pattern.permute.xlu0 31
        %2042 = vperm.xlu0 %2041, %v529
        %v2043 = vpop.permute.xlu0 %2042
        %2045 = vset.pattern.permute.xlu0 31
        %2046 = vperm.xlu0 %2045, %v530
        %v2047 = vpop.permute.xlu0 %2046
        %v2049 = vadd.f32 %v2032, %v2035
        %v2050 = vadd.f32 %v2032, %v2039
        %v2051 = vadd.f32 %v2032, %v2043
        %v2052 = vadd.f32 %v2032, %v2047
        %v2053 = vstv %s2027
        %v2054 = vmul.f32 %v2053, %v523
        %v2055 = vmul.f32 %v2053, %v524
        %v2056 = vmul.f32 %v2053, %v525
        %v2057 = vmul.f32 %v2053, %v526
        %v2058 = vadd.f32 %v2049, %v2054
        %v2059 = vadd.f32 %v2050, %v2055
        %v2060 = vadd.f32 %v2051, %v2056
        %v2061 = vadd.f32 %v2052, %v2057
        %v2062 = vand.u32 2147483647, %v2058
        %v2063 = vand.u32 2147483647, %v2059
        %v2064 = vand.u32 2147483647, %v2060
        %v2065 = vand.u32 2147483647, %v2061
        %v2066 = vstv %s2028
        %v2067 = vmul.f32 %v2066, %v2062
        %v2068 = vmul.f32 %v2066, %v2063
        %v2069 = vmul.f32 %v2066, %v2064
        %v2070 = vmul.f32 %v2066, %v2065
        %v2071 = vadd.f32 %v2023, %v2067
        %v2072 = vadd.f32 %v2024, %v2068
        %v2073 = vadd.f32 %v2025, %v2069
        %v2074 = vadd.f32 %v2026, %v2070
        %v2075 = vld [vmem:[%s3] sm:$0x1]
        %v2076 = vld [vmem:[%s502] sm:$0xff]
        %v2077 = vld [vmem:[%s502 + $0x8] sm:$0xff]
        %v2078 = vld [vmem:[%s502 + $0x10] sm:$0xff]
        %v2079 = vld [vmem:[%s502 + $0x18] sm:$0xff]
        %v2081 = vlaneseq
        %v2082 = vshrl.u32 %v2081, 7
        %v2083 = vsub.s32 0, %v2082
        %v2084 = vrot.slane %v2075, %v2083
        %2087 = vset.pattern.permute.xlu0 0
        %2088 = vperm.xlu0 %2087, %v2076
        %v2089 = vpop.permute.xlu0 %2088
        %2092 = vset.pattern.permute.xlu0 0
        %2093 = vperm.xlu0 %2092, %v2077
        %v2094 = vpop.permute.xlu0 %2093
        %2097 = vset.pattern.permute.xlu0 0
        %2098 = vperm.xlu0 %2097, %v2078
        %v2099 = vpop.permute.xlu0 %2098
        %2102 = vset.pattern.permute.xlu0 0
        %2103 = vperm.xlu0 %2102, %v2079
        %v2104 = vpop.permute.xlu0 %2103
        %v2106 = vadd.f32 %v2084, %v2089
        %v2107 = vadd.f32 %v2084, %v2094
        %v2108 = vadd.f32 %v2084, %v2099
        %v2109 = vadd.f32 %v2084, %v2104
        %s2110 = sld [smem:[#allocation2]]
        %v2111 = vstv %s2110
        %v2112 = vmul.f32 %v2111, %v523
        %v2113 = vmul.f32 %v2111, %v524
        %v2114 = vmul.f32 %v2111, %v525
        %v2115 = vmul.f32 %v2111, %v526
        %v2116 = vadd.f32 %v2106, %v2112
        %v2117 = vadd.f32 %v2107, %v2113
        %v2118 = vadd.f32 %v2108, %v2114
        %v2119 = vadd.f32 %v2109, %v2115
        %v2120 = vadd.f32 %v2116, %v2071
        %v2121 = vadd.f32 %v2117, %v2072
        %v2122 = vadd.f32 %v2118, %v2073
        %v2123 = vadd.f32 %v2119, %v2074
        %v2124 = vld [vmem:[%s508] sm:$0xf]
        %v2125 = vld [vmem:[%s508 + $0x4] sm:$0xf]
        %v2126 = vld [vmem:[%s508 + $0x8] sm:$0xf]
        %v2127 = vld [vmem:[%s508 + $0xc] sm:$0xf]
        %v2128 = vunpack.c.l.bf16 %v2124
        %v2129 = vunpack.c.l.bf16 %v2125
        %v2130 = vunpack.c.l.bf16 %v2126
        %v2131 = vunpack.c.l.bf16 %v2127
        %v2132 = vadd.f32 %v2120, %v2128
        %v2133 = vadd.f32 %v2121, %v2129
        %v2134 = vadd.f32 %v2122, %v2130
        %v2135 = vadd.f32 %v2123, %v2131
        %2136 = vmax.xlane.f32.xlu0 %v2132
        %v2137 = vpop.xlane.xlu0 %2136
        %2138 = vmax.xlane.f32.xlu0 %v2133
        %v2139 = vpop.xlane.xlu0 %2138
        %2140 = vmax.xlane.f32.xlu0 %v2134
        %v2141 = vpop.xlane.xlu0 %2140
        %2142 = vmax.xlane.f32.xlu0 %v2135
        %v2143 = vpop.xlane.xlu0 %2142
        %v2144 = vsub.f32 %v2132, %v2137
        %v2145 = vsub.f32 %v2133, %v2139
        %v2146 = vsub.f32 %v2134, %v2141
        %v2147 = vsub.f32 %v2135, %v2143
        %v2148 = vmul.f32 %v2144, 1.442695
        %v2149 = vpow.pop %v2148
        %v2150 = vmul.f32 %v2145, 1.442695
        %v2151 = vpow.pop %v2150
        %v2152 = vmul.f32 %v2146, 1.442695
        %v2153 = vpow.pop %v2152
        %v2154 = vmul.f32 %v2147, 1.442695
        %v2155 = vpow.pop %v2154
        %2156 = vadd.xlane.f32.xlu0 %v2149
        %v2157 = vpop.xlane.xlu0 %2156
        %2158 = vadd.xlane.f32.xlu0 %v2151
        %v2159 = vpop.xlane.xlu0 %2158
        %2160 = vadd.xlane.f32.xlu0 %v2153
        %v2161 = vpop.xlane.xlu0 %2160
        %2162 = vadd.xlane.f32.xlu0 %v2155
        %v2163 = vpop.xlane.xlu0 %2162
        %v2164 = vrcp.pop %v2157
        %v2165 = vrcp.pop %v2159
        %v2166 = vrcp.pop %v2161
        %v2167 = vrcp.pop %v2163
        %v2168 = vmul.f32 %v2149, %v2164
        %v2169 = vmul.f32 %v2151, %v2165
        %v2170 = vmul.f32 %v2153, %v2166
        %v2171 = vmul.f32 %v2155, %v2167
        %2172 = vst [vmem:[%s484] sm:$0xff] %v2168
        %2173 = vst [vmem:[%s484 + $0x8] sm:$0xff] %v2169
        %2174 = vst [vmem:[%s484 + $0x10] sm:$0xff] %v2170
        %2175 = vst [vmem:[%s484 + $0x18] sm:$0xff] %v2171
        %v2176 = vld [vmem:[%s1] sm:$0xff]
        %v2177 = vld [vmem:[%s1 + $0x8] sm:$0xff]
        %v2178 = vld [vmem:[%s1 + $0x10] sm:$0xff]
        %v2179 = vld [vmem:[%s1 + $0x18] sm:$0xff]
        %v2180 = vld [vmem:[%s1 + $0x20] sm:$0xff]
        %v2181 = vld [vmem:[%s1 + $0x28] sm:$0xff]
        %v2182 = vld [vmem:[%s1 + $0x30] sm:$0xff]
        %v2183 = vld [vmem:[%s1 + $0x38] sm:$0xff]
        %v2184 = vld [vmem:[%s1 + $0x40] sm:$0xff]
        %v2185 = vld [vmem:[%s1 + $0x48] sm:$0xff]
        %v2186 = vld [vmem:[%s1 + $0x50] sm:$0xff]
        %v2187 = vld [vmem:[%s1 + $0x58] sm:$0xff]
        %v2188 = vld [vmem:[%s1 + $0x60] sm:$0xff]
        %v2189 = vld [vmem:[%s1 + $0x68] sm:$0xff]
        %v2190 = vld [vmem:[%s1 + $0x70] sm:$0xff]
        %v2191 = vld [vmem:[%s1 + $0x78] sm:$0xff]
        %v2192 = vld [vmem:[%s10] sm:$0x1]
        %v2194 = vlaneseq
        %v2195 = vshrl.u32 %v2194, 7
        %v2196 = vsub.s32 0, %v2195
        %v2197 = vrot.slane %v2192, %v2196
        %2199 = vmatprep.subr.mxu0 0.0
        %2200 = vmatpush1.msra.mxu0 %v2176
        %2201 = vmatprep.subr.mxu0 0.0
        %2202 = vmatpush1.msra.mxu0 %v2177
        %2203 = vmatprep.subr.mxu0 0.0
        %2204 = vmatpush1.msra.mxu0 %v2178
        %2205 = vmatprep.subr.mxu0 0.0
        %2206 = vmatpush1.msra.mxu0 %v2179
        %2207 = vmatprep.subr.mxu0 0.0
        %2208 = vmatpush1.msra.mxu0 %v2180
        %2209 = vmatprep.subr.mxu0 0.0
        %2210 = vmatpush1.msra.mxu0 %v2181
        %2211 = vmatprep.subr.mxu0 0.0
        %2212 = vmatpush1.msra.mxu0 %v2182
        %2213 = vmatprep.subr.mxu0 0.0
        %2214 = vmatpush1.msra.mxu0 %v2183
        %2215 = vmatprep.subr.mxu0 0.0
        %2216 = vmatpush1.msra.mxu0 %v2184
        %2217 = vmatprep.subr.mxu0 0.0
        %2218 = vmatpush1.msra.mxu0 %v2185
        %2219 = vmatprep.subr.mxu0 0.0
        %2220 = vmatpush1.msra.mxu0 %v2186
        %2221 = vmatprep.subr.mxu0 0.0
        %2222 = vmatpush1.msra.mxu0 %v2187
        %2223 = vmatprep.subr.mxu0 0.0
        %2224 = vmatpush1.msra.mxu0 %v2188
        %2225 = vmatprep.subr.mxu0 0.0
        %2226 = vmatpush1.msra.mxu0 %v2189
        %2227 = vmatprep.subr.mxu0 0.0
        %2228 = vmatpush1.msra.mxu0 %v2190
        %2229 = vmatprep.subr.mxu0 0.0
        %2230 = vmatpush1.msra.mxu0 %v2191
        %2231 = vmatprep.subr.mxu0 0.0
        %2232 = vmatpush1.msra.mxu0 0.0
        %2233 = vmatprep.subr.mxu0 0.0
        %2234 = vmatpush1.msra.mxu0 0.0
        %2235 = vmatprep.subr.mxu0 0.0
        %2236 = vmatpush1.msra.mxu0 0.0
        %2237 = vmatprep.subr.mxu0 0.0
        %2238 = vmatpush1.msra.mxu0 0.0
        %2239 = vmatprep.subr.mxu0 0.0
        %2240 = vmatpush1.msra.mxu0 0.0
        %2241 = vmatprep.subr.mxu0 0.0
        %2242 = vmatpush1.msra.mxu0 0.0
        %2243 = vmatprep.subr.mxu0 0.0
        %2244 = vmatpush1.msra.mxu0 0.0
        %2245 = vmatprep.subr.mxu0 0.0
        %2246 = vmatpush1.msra.mxu0 0.0
        %2247 = vmatprep.subr.mxu0 0.0
        %2248 = vmatpush1.msra.mxu0 0.0
        %2249 = vmatprep.subr.mxu0 0.0
        %2250 = vmatpush1.msra.mxu0 0.0
        %2251 = vmatprep.subr.mxu0 0.0
        %2252 = vmatpush1.msra.mxu0 0.0
        %2253 = vmatprep.subr.mxu0 0.0
        %2254 = vmatpush1.msra.mxu0 0.0
        %2255 = vmatprep.subr.mxu0 0.0
        %2256 = vmatpush1.msra.mxu0 0.0
        %2257 = vmatprep.subr.mxu0 0.0
        %2258 = vmatpush1.msra.mxu0 0.0
        %2259 = vmatprep.subr.mxu0 0.0
        %2260 = vmatpush1.msra.mxu0 0.0
        %2261 = vmatprep.subr.mxu0 0.0
        %2262 = vmatpush1.msra.mxu0 0.0
        %2263 = vmatprep.mubr.f32.mxu0 0.0
        %2264 = vmatmul.mubr.f32.gmra.mrb[0].mxu0 %v2168
        %v2265 = vpop.f32.mrb[0].mxu0
        %v2266 = vadd.f32 %v2197, %v2265
        %v2267 = vpop.f32.mrb[0].mxu0
        %2268 = vmatprep.mubr.f32.mxu0 0.0
        %2269 = vmatmul.mubr.f32.gmra.mrb[0].mxu0 %v2169
        %v2270 = vpop.f32.mrb[0].mxu0
        %v2271 = vadd.f32 %v2197, %v2270
        %v2272 = vpop.f32.mrb[0].mxu0
        %2273 = vmatprep.mubr.f32.mxu0 0.0
        %2274 = vmatmul.mubr.f32.gmra.mrb[0].mxu0 %v2170
        %v2275 = vpop.f32.mrb[0].mxu0
        %v2276 = vadd.f32 %v2197, %v2275
        %v2277 = vpop.f32.mrb[0].mxu0
        %2278 = vmatprep.mubr.f32.mxu0 0.0
        %2279 = vmatmul.mubr.f32.gmra.mrb[0].mxu0 %v2171
        %v2280 = vpop.f32.mrb[0].mxu0
        %v2281 = vadd.f32 %v2197, %v2280
        %v2282 = vpop.f32.mrb[0].mxu0
        %2283 = vdwg.mxu0
        %v2284 = vmax.f32 %v2266, 0.0
        %v2285 = vmax.f32 %v2271, 0.0
        %v2286 = vmax.f32 %v2276, 0.0
        %v2287 = vmax.f32 %v2281, 0.0
        %vm2288 = vcmask 261120
        %2289 = vst.msk [vmem:[%s521] sm:$0xff] %vm2288, %v2284
        %2290 = vst.msk [vmem:[%s521 + $0x8] sm:$0xff] %vm2288, %v2285
        %2291 = vst.msk [vmem:[%s521 + $0x10] sm:$0xff] %vm2288, %v2286
        %2292 = vst.msk [vmem:[%s521 + $0x18] sm:$0xff] %vm2288, %v2287
        %s2293 = sand.u32 %s289, 1
        %s2294 = scalar_lea.sflag [#allocation4], %s2293
        %s2295 = sand.u32 %s289, 1
        %s2296 = smul.addr %s2295, 32
        %s2297 = scalar_lea.vmem [#allocation8], %s2296
        %s2298 = smul.u32 4, %s30
        %p2299 = scmp.lt.s32.totalorder %s2298, 15
        %s2300 = scalar_select %p2299, %s2298, 15
        %s2301 = smul.addr %s2300, 8
        %s2302 = scalar_lea.vmem %s12, %s2301
        // Predicated region
        $region73: #{tpu_custom_call.1} parent=63 // pred_check
          %p2303 = pneg %p299
        $region74: #{tpu_custom_call.1} parent=63 // pred_check_branch
          %2305 = sbr.rel (%p2303) target = $region76
        $region75: #{tpu_custom_call.1} parent=63 // pred_region
          %s2306 = smul.u32 4, %s30
          %s2308 = ssub.s32 512, 512
          %2309 = vsyncadd %s2294, %s2308
          %s2310 = smul.addr %s2306, 128
          %s2311 = scalar_lea.hbm %s11, %s2310
          %s2312 = sshll.u32 %s2297, 4
          %s2313 = int_to_ptr.vmem [resolvable:$true] %s2312
          %2318 = dma.vmem_to_hbm [thread:$0]  %s2313, 512, %s2311, %s2294, 128, 128, 8
        $region76: #{tpu_custom_call.1} parent=63 // pred_fallthru
          _
        // Predicated region
        $region77: #{tpu_custom_call.1} parent=63 // pred_check
          %p2319 = pneg %p325
        $region78: #{tpu_custom_call.1} parent=63 // pred_check_branch
          %2321 = sbr.rel (%p2319) target = $region80
        $region79: #{tpu_custom_call.1} parent=63 // pred_region
          %s2322 = smul.u32 4, %s30
        $region80: #{tpu_custom_call.1} parent=63 // pred_fallthru
          _
      $region64: #{tpu_custom_call.1} parent=5 // pred_fallthru
        _
      %p2323 = scmp.le.s32.totalorder 2, %s25
      // Predicated region
      $region81: #{tpu_custom_call.1} parent=5 // pred_check
        %p2324 = pneg %p2323
      $region82: #{tpu_custom_call.1} parent=5 // pred_check_branch
        %2326 = sbr.rel (%p2324) target = $region84
      $region83: #{tpu_custom_call.1} parent=5 // pred_region
        %s2327 = ssub.s32 %s25, 2
        // Predicated region
        $region85: #{tpu_custom_call.1} parent=83 // pred_check
          %p2328 = pneg %p305
        $region86: #{tpu_custom_call.1} parent=83 // pred_check_branch
          %2330 = sbr.rel (%p2328) target = $region88
        $region87: #{tpu_custom_call.1} parent=83 // pred_region
          %s2331 = sand.u32 %s290, 1
          %s2332 = scalar_lea.sflag [#allocation4], %s2331
          %s2333 = sand.u32 %s290, 1
          %s2334 = smul.addr %s2333, 32
          %s2335 = scalar_lea.vmem [#allocation8], %s2334
          %2336 = dma.done %s2332, 512
        $region88: #{tpu_custom_call.1} parent=83 // pred_fallthru
          _
        // Predicated region
        $region89: #{tpu_custom_call.1} parent=83 // pred_check
          %p2337 = pneg %p331
        $region90: #{tpu_custom_call.1} parent=83 // pred_check_branch
          %2339 = sbr.rel (%p2337) target = $region92
        $region91: #{tpu_custom_call.1} parent=83 // pred_region
          %s2340 = smul.u32 4, %s31
          %p2341 = scmp.lt.s32.totalorder %s2340, 15
          %s2342 = scalar_select %p2341, %s2340, 15
          %s2343 = smul.addr %s2342, 8
          %s2344 = scalar_lea.vmem %s12, %s2343
        $region92: #{tpu_custom_call.1} parent=83 // pred_fallthru
          _
      $region84: #{tpu_custom_call.1} parent=5 // pred_fallthru
        _
    $region6: #{tpu_custom_call.1} parent=1 // loop_footer
      %s29 = sadd.s32 1, %s25
    $region7: #{tpu_custom_call.1} parent=1 // loop_footer_branch
      %24 = sbr.rel target = $region3
    $region8: #{tpu_custom_call.1} parent=1 // loop_exit
      _
    %2345 = vsyncpa [#allocation4], 1
    %s2346 = scalar_lea.sflag [#allocation4], 1
    %2347 = vsyncpa %s2346, 1
    %2348 = vsyncpa [#allocation5], 1
    %s2349 = scalar_lea.sflag [#allocation5], 1
    %2350 = vsyncpa %s2349, 1
    %2351 = vsyncpa [#allocation7], 1

</llo_original>
